<compile_context>
chip_gen: v7x
topology: tpu7x:2x2x1
jax: 0.10.0
libtpu: 0.0.40
codegen_flags: <defaults>
</compile_context>

<pallas_src>
import functools

import jax
import jax.numpy as jnp
from jax.experimental import pallas as pl
from jax.experimental.pallas import tpu as pltpu


# ----------------------------------------------------------------------------
# Pallas kernels: fused im2col-matmul + folded-BN shift + ReLU
# ----------------------------------------------------------------------------
def _mm_bn_relu_kernel(x_ref, w_ref, t_ref, o_ref):
    # Single-K-step variant: no f32 accumulator read-modify-write.
    acc = jnp.dot(x_ref[...], w_ref[...], preferred_element_type=jnp.float32)
    o_ref[...] = jnp.maximum(acc + t_ref[...], 0.0).astype(o_ref.dtype)


def _mm_bn_relu_acc_kernel(x_ref, w_ref, t_ref, o_ref, acc_ref):
    # K-tiled variant: reduction axis last, resident f32 VMEM accumulator.
    @pl.when(pl.program_id(2) == 0)
    def _():
        acc_ref[...] = jnp.zeros_like(acc_ref)

    acc_ref[...] += jnp.dot(x_ref[...], w_ref[...],
                            preferred_element_type=jnp.float32)

    @pl.when(pl.program_id(2) == pl.num_programs(2) - 1)
    def _():
        o_ref[...] = jnp.maximum(acc_ref[...] + t_ref[...], 0.0).astype(o_ref.dtype)


# ----------------------------------------------------------------------------
# Tile selection (per-generation VMEM budget, megacore aware)
# ----------------------------------------------------------------------------
def _round_up(v, m):
    return ((v + m - 1) // m) * m


@functools.lru_cache(maxsize=1)
def _tpu_budget():
    """Returns (vmem budget bytes, multi_core?).  v7x: 64 MiB VMEM/TC, 2 TCs."""
    try:
        vmem = int(pltpu.get_tpu_info().vmem_capacity_bytes)
    except Exception:
        vmem = 128 << 20
    budget = int(min((vmem * 3) // 4, 96 << 20))
    multi_core = vmem <= (64 << 20)          # heuristic: v7x generation
    return budget, multi_core


def _footprint_bytes(tm, tk, tco, nk):
    # Double-buffered bf16 input/weight/output blocks (+ f32 acc when K split).
    b = 2 * (tm * tk * 2) + 2 * (tk * tco * 2) + 2 * (tm * tco * 2) + 2 * (tco * 4)
    if nk > 1:
        b += tm * tco * 4
    return b


def _choose_tiles(meff, keff, ceff, budget, multi_core, tk_cap=None):
    """Pick (TM, TK, TCO, padded_M).

    Preference: full-Cout tile (read the 9x im2col exactly once), a single K
    step (no accumulator RMW), then the largest M tile whose double-buffered
    footprint fits the per-generation VMEM budget.
    """
    limit = max(budget - (6 << 20), 8 << 20)

    # ---- M tile candidates: aligned divisors of meff (largest first) -------
    cap_raw = 8192 if keff <= 256 else (4096 if keff <= 1536 else 2048)
    tm_cands = []
    if meff < 8:
        tm_cands.append((meff, meff))
    else:
        t = min(cap_raw, meff)
        t -= t % 8
        while t >= 8:
            if meff % t == 0:
                tm_cands.append((t, meff))
            t -= 8
        if (not tm_cands or tm_cands[0][0] < 256) and meff > 256:
            # Awkward factorization: pad the rows rather than take tiny tiles.
            hi = max(256, min(cap_raw, _round_up(meff, 256)))
            pads = sorted({c for c in (2048, 1024, 512, 256) if c <= hi},
                          reverse=True)
            tm_cands = [(c, _round_up(meff, c)) for c in pads] + tm_cands

    # ---- K tile candidates: single step preferred, else multiples of 128 ---
    tk_limit = keff if tk_cap is None else min(keff, tk_cap)
    tk_cands = []
    if keff <= tk_limit:
        tk_cands.append(keff)
    t = (min(keff - 1, tk_limit, 2304) // 128) * 128
    while t >= 128:
        if keff % t == 0 and t not in tk_cands:
            tk_cands.append(t)
        t -= 128
    if not tk_cands:
        tk_cands = [keff]

    # ---- Cout tile candidates: largest first (fewest im2col re-reads) ------
    tco_cands = [c for c in (512, 256, 128) if c <= ceff and ceff % c == 0]
    if not tco_cands:
        tco_cands = [ceff]

    for tco in tco_cands:
        for tk in tk_cands:
            nk = keff // tk
            for tm, mp in tm_cands:
                if _footprint_bytes(tm, tk, tco, nk) > limit:
                    continue
                # Multi-core (v7x): keep >= 2 parallel tiles so both TCs work.
                if multi_core and (mp // tm) * (ceff // tco) < 2:
                    if tco >= 256 and (tco // 2) % 128 == 0:
                        tco = tco // 2
                    elif tm >= 16 and (tm // 2) % 8 == 0 and mp % (tm // 2) == 0:
                        tm = tm // 2
                return tm, tk, tco, mp

    tm, mp = tm_cands[0] if tm_cands else (8, _round_up(meff, 8))
    return tm, tk_cands[-1], tco_cands[-1], mp


# ----------------------------------------------------------------------------
# Fused Conv3x3 (pad=1) + folded BN + ReLU
# ----------------------------------------------------------------------------
def conv3x3_bn_relu(x, w, shift, *, tk_cap=None):
    """x: (N,H,W,Cin), w: (3,3,Cin,Cout) f32 (BN scale pre-folded),
    shift: (Cout,) f32 (bias + BN pre-folded).  Returns (N,H,W,Cout) bf16."""
    N, H, W, Cin = x.shape
    Cout = w.shape[-1]
    K = 9 * Cin
    M = N * H * W
    budget, multi_core = _tpu_budget()

    # --- im2col: single bf16 HBM materialization, K pre-padded in the concat -
    Kp = _round_up(K, 32)                      # 27 -> 32; others already aligned
    xb = x.astype(jnp.bfloat16)
    xp = jnp.pad(xb, ((0, 0), (1, 1), (1, 1), (0, 0)))
    cols = [xp[:, dy:dy + H, dx:dx + W, :] for dy in range(3) for dx in range(3)]
    if Kp != K:
        cols.append(jnp.zeros((N, H, W, Kp - K), jnp.bfloat16))
    xcol = jnp.concatenate(cols, axis=-1)      # (N, H, W, Kp)

    wcol = w.reshape(K, Cout)
    if Kp != K:
        wcol = jnp.pad(wcol, ((0, Kp - K), (0, 0)))

    # --- lane packing: Cout < 128 -> fold pixel pairs so stores are lane-dense
    pack = 2 if (Cout < 128 and M % 2 == 0) else 1
    Meff, Keff, Ceff = M // pack, Kp * pack, Cout * pack
    xeff = xcol.reshape(Meff, Keff)            # free row-major reshape
    if pack == 2:
        z = jnp.zeros_like(wcol)
        weff = jnp.concatenate(                # block-diag (2*Kp, 2*Cout)
            [jnp.concatenate([wcol, z], axis=1),
             jnp.concatenate([z, wcol], axis=1)], axis=0)
        shifteff = jnp.concatenate([shift, shift])
    else:
        weff, shifteff = wcol, shift
    weff = weff.astype(jnp.bfloat16)
    shifteff = shifteff.reshape(1, Ceff).astype(jnp.float32)

    # --- tiling ---------------------------------------------------------------
    TM, TK, TCO, Mp = _choose_tiles(Meff, Keff, Ceff, budget, multi_core,
                                    tk_cap=tk_cap)
    if Mp != Meff:
        xeff = jnp.pad(xeff, ((0, Mp - Meff), (0, 0)))
    nk = Keff // TK

    if nk == 1:
        out = pl.pallas_call(
            _mm_bn_relu_kernel,
            out_shape=jax.ShapeDtypeStruct((Mp, Ceff), jnp.bfloat16),
            grid_spec=pltpu.PrefetchScalarGridSpec(
                num_scalar_prefetch=0,
                grid=(Mp // TM, Ceff // TCO),
                in_specs=[
                    pl.BlockSpec((TM, TK), lambda i, j: (i, 0)),
                    pl.BlockSpec((TK, TCO), lambda i, j: (0, j)),
                    pl.BlockSpec((1, TCO), lambda i, j: (0, j)),
                ],
                out_specs=pl.BlockSpec((TM, TCO), lambda i, j: (i, j)),
            ),
            compiler_params=pltpu.CompilerParams(
                dimension_semantics=("parallel", "parallel"),
                vmem_limit_bytes=budget,
            ),
        )(xeff, weff, shifteff)
    else:
        out = pl.pallas_call(
            _mm_bn_relu_acc_kernel,
            out_shape=jax.ShapeDtypeStruct((Mp, Ceff), jnp.bfloat16),
            grid_spec=pltpu.PrefetchScalarGridSpec(
                num_scalar_prefetch=0,
                grid=(Mp // TM, Ceff // TCO, nk),   # reduction axis last
                in_specs=[
                    pl.BlockSpec((TM, TK), lambda i, j, k: (i, k)),
                    pl.BlockSpec((TK, TCO), lambda i, j, k: (k, j)),
                    pl.BlockSpec((1, TCO), lambda i, j, k: (0, j)),
                ],
                out_specs=pl.BlockSpec((TM, TCO), lambda i, j, k: (i, j)),
                scratch_shapes=[pltpu.VMEM((TM, TCO), jnp.float32)],
            ),
            compiler_params=pltpu.CompilerParams(
                dimension_semantics=("parallel", "parallel", "arbitrary"),
                vmem_limit_bytes=budget,
            ),
        )(xeff, weff, shifteff)

    if Mp != Meff:
        out = out[:Meff]
    return out.reshape(N, H, W, Cout)


# ----------------------------------------------------------------------------
# MaxPool2d(2, stride=2, return_indices=True)  (plain-JAX glue)
# ----------------------------------------------------------------------------
def maxpool2x2_indices(x):
    """x: (N,H,W,C) -> (pooled (N,H/2,W/2,C), flat int32 indices into H*W plane)."""
    N, H, W, C = x.shape
    Hp, Wp = H // 2, W // 2
    xw = x.reshape(N, Hp, 2, Wp, 2, C).transpose(0, 1, 3, 2, 4, 5)
    xw = xw.reshape(N, Hp, Wp, 4, C)          # window order (0,0),(0,1),(1,0),(1,1)
    idx_in_win = jnp.argmax(xw, axis=3)       # first-max tie-break (as in PyTorch)
    pooled = jnp.max(xw, axis=3)
    ii = jnp.arange(Hp).reshape(1, Hp, 1, 1)
    jj = jnp.arange(Wp).reshape(1, 1, Wp, 1)
    row = 2 * ii + idx_in_win // 2
    col = 2 * jj + idx_in_win % 2
    flat = row * W + col
    return pooled, flat.astype(jnp.int32)


# ----------------------------------------------------------------------------
# Parameter construction (deterministic, synthetic) with explicit BN folding
# ----------------------------------------------------------------------------
_ENC_CFG = [
    [(None, 64), (64, 64)],
    [(64, 128), (128, 128)],
    [(128, 256), (256, 256), (256, 256)],
    [(256, 512), (512, 512), (512, 512)],
    [(512, 512), (512, 512), (512, 512)],
]


def fold_conv_bn(w, b, gamma, beta, running_mean, running_var, eps=1e-5):
    """Inference-mode Conv+BN folding:  y = (W*x + b - mean)*gamma/sqrt(var+eps) + beta."""
    scale = gamma / jnp.sqrt(running_var + eps)
    w_folded = w * scale.reshape(1, 1, 1, -1)
    shift = (b - running_mean) * scale + beta
    return w_folded, shift


def init_conv_bn_folded(key, cin, cout):
    k1, k2, k3, k4 = jax.random.split(key, 4)
    fan_in = 9 * cin
    w = jax.random.normal(k1, (3, 3, cin, cout), jnp.float32) / jnp.sqrt(float(fan_in))
    b = 0.01 * jax.random.normal(k2, (cout,), jnp.float32)
    gamma = 1.0 + 0.1 * jax.random.normal(k3, (cout,), jnp.float32)
    beta = 0.1 * jax.random.normal(k4, (cout,), jnp.float32)
    # Default (untrained) running stats: mean=0, var=1.
    return fold_conv_bn(w, b, gamma, beta,
                        jnp.zeros((cout,), jnp.float32),
                        jnp.ones((cout,), jnp.float32))


def build_params(key, in_chn):
    params = []
    for stage in _ENC_CFG:
        stage_p = []
        for (ci, co) in stage:
            ci = in_chn if ci is None else ci
            key, sub = jax.random.split(key)
            stage_p.append(init_conv_bn_folded(sub, ci, co))
        params.append(stage_p)
    return params


# ----------------------------------------------------------------------------
# SegNet encoder forward
# ----------------------------------------------------------------------------
def _encoder_core(x_nchw, params):
    x = jnp.transpose(x_nchw, (0, 2, 3, 1)).astype(jnp.bfloat16)   # NCHW -> NHWC
    inds = []
    for stage_params in params:
        for (w, t) in stage_params:
            x = conv3x3_bn_relu(x, w, t)
        x, idx = maxpool2x2_indices(x)
        inds.append(jnp.transpose(idx, (0, 3, 1, 2)))              # NHWC -> NCHW
    x = jnp.transpose(x, (0, 3, 1, 2)).astype(jnp.float32)         # NHWC -> NCHW
    return x, inds


def encoder_sizes(input_shape_nchw):
    N, C, H, W = input_shape_nchw
    return [
        (N, C, H, W),
        (N, 64, H // 2, W // 2),
        (N, 128, H // 4, W // 4),
        (N, 256, H // 8, W // 8),
        (N, 512, H // 16, W // 16),
    ]


def segnet_encoder_forward(x_nchw, params):
    """Mirrors SegNet_Encoder.forward: returns (x, [ind1..ind5], [size0..size4])."""
    x, inds = _encoder_core(x_nchw, params)
    return x, inds, encoder_sizes(x_nchw.shape)


# ----------------------------------------------------------------------------
# Reference + checks
# ----------------------------------------------------------------------------
def _conv_bn_relu_ref(x_nhwc, w, shift):
    y = jax.lax.conv_general_dilated(
        x_nhwc.astype(jnp.float32), w.astype(jnp.float32),
        window_strides=(1, 1), padding="SAME",
        dimension_numbers=("NHWC", "HWIO", "NHWC"))
    return jnp.maximum(y + shift, 0.0)


def _check_close(a, b, tol=0.05):
    a = jnp.asarray(a, jnp.float32)
    b = jnp.asarray(b, jnp.float32)
    err = float(jnp.max(jnp.abs(a - b)))
    scale = float(jnp.max(jnp.abs(b))) + 1e-6
    assert err <= tol * scale + 1e-2, ("kernel/reference mismatch", err, scale)


if __name__ == "__main__":
    IN_CHN = 3
    N, H, W = 2, 32, 32                       # spatial must be divisible by 2^5

    key = jax.random.PRNGKey(0)
    key, xkey, pkey = jax.random.split(key, 3)
    x = jax.random.normal(xkey, (N, IN_CHN, H, W), jnp.float32)
    params = build_params(pkey, IN_CHN)

    # Spot-check the lane-packed single-K path (Cin=3 -> 64) vs a f32 reference.
    x_nhwc = jnp.transpose(x, (0, 2, 3, 1))
    w1, t1 = params[0][0]
    _check_close(conv3x3_bn_relu(x_nhwc, w1, t1), _conv_bn_relu_ref(x_nhwc, w1, t1))

    # Spot-check the K-tiled accumulator path (forced via tk_cap).
    key, ck, wk = jax.random.split(key, 3)
    xc = jax.random.normal(ck, (2, 8, 8, 256), jnp.float32)
    wc, tc = init_conv_bn_folded(wk, 256, 256)
    _check_close(conv3x3_bn_relu(xc, wc, tc, tk_cap=1152), _conv_bn_relu_ref(xc, wc, tc))

    # Full encoder forward.
    fwd = jax.jit(functools.partial(_encoder_core, params=params))
    out, inds = fwd(x)
    out = jax.block_until_ready(out)
    sizes = encoder_sizes(x.shape)

    assert out.shape == (N, 512, H // 32, W // 32), out.shape
    assert bool(jnp.all(jnp.isfinite(out)))
    assert len(inds) == 5 and len(sizes) == 5
    assert inds[0].shape == (N, 64, H // 2, W // 2), inds[0].shape
    assert inds[4].shape == (N, 512, H // 32, W // 32), inds[4].shape
    assert sizes[0] == (N, IN_CHN, H, W)
    print("KERNEL_OK")
</pallas_src>

<mosaic_0001>
module attributes {stable_mosaic.version = 11 : i64} {
  func.func @_mm_bn_relu_kernel(%arg0: i32, %arg1: i32, %arg2: memref<1024x64xbf16, #tpu.memory_space<vmem>>, %arg3: memref<64x128xbf16, #tpu.memory_space<vmem>>, %arg4: memref<1x128xf32, #tpu.memory_space<vmem>>, %arg5: memref<1024x128xbf16, #tpu.memory_space<vmem>>) attributes {dimension_semantics = [#tpu.dimension_semantics<parallel>, #tpu.dimension_semantics<parallel>], iteration_bounds = array<i64: 1, 1>, scalar_prefetch = 0 : i64, scratch_operands = 0 : i64, tpu.core_type = #tpu.core_type<tc>, window_params = [{transform_indices = @transform_0, window_bounds = array<i64: 1024, 64>}, {transform_indices = @transform_1, window_bounds = array<i64: 64, 128>}, {transform_indices = @transform_2, window_bounds = array<i64: 1, 128>}, {transform_indices = @transform_3, window_bounds = array<i64: 1024, 128>}]} {
    %c0 = arith.constant 0 : index
    %c0_0 = arith.constant 0 : index
    %0 = vector.load %arg2[%c0, %c0_0] : memref<1024x64xbf16, #tpu.memory_space<vmem>>, vector<1024x64xbf16>
    %c0_1 = arith.constant 0 : index
    %c0_2 = arith.constant 0 : index
    %1 = vector.load %arg3[%c0_1, %c0_2] : memref<64x128xbf16, #tpu.memory_space<vmem>>, vector<64x128xbf16>
    %cst = arith.constant dense<0.000000e+00> : vector<1024x128xf32>
    %2 = tpu.matmul %0, %1, %cst {dimension_numbers = #tpu.dot_dimension_numbers<[1], [0], [0], [1], [0, 0, 1, 1], [], []>} : vector<1024x64xbf16>, vector<64x128xbf16>, vector<1024x128xf32> -> vector<1024x128xf32>
    %c0_3 = arith.constant 0 : index
    %c0_4 = arith.constant 0 : index
    %3 = vector.load %arg4[%c0_3, %c0_4] : memref<1x128xf32, #tpu.memory_space<vmem>>, vector<1x128xf32>
    %4 = vector.broadcast %3 : vector<1x128xf32> to vector<1024x128xf32>
    %5 = arith.addf %2, %4 : vector<1024x128xf32>
    %cst_5 = arith.constant 0.000000e+00 : f32
    %6 = vector.broadcast %cst_5 : f32 to vector<1024x128xf32>
    %7 = arith.maximumf %5, %6 : vector<1024x128xf32>
    %8 = arith.truncf %7 : vector<1024x128xf32> to vector<1024x128xbf16>
    %c0_6 = arith.constant 0 : index
    %c0_7 = arith.constant 0 : index
    %9 = vector.load %arg5[%c0_6, %c0_7] : memref<1024x128xbf16, #tpu.memory_space<vmem>>, vector<1024x128xbf16>
    tpu.vector_store %arg5[%c0_6, %c0_7], %8 {strides = array<i32>} : memref<1024x128xbf16, #tpu.memory_space<vmem>>, vector<1024x128xbf16>,
    return
  }
  func.func @transform_0(%arg0: i32, %arg1: i32) -> (i32, i32) {
    %c0_i32 = arith.constant 0 : i32
    %c0_i32_0 = arith.constant 0 : i32
    return %arg0, %c0_i32 : i32, i32
  }
  func.func @transform_1(%arg0: i32, %arg1: i32) -> (i32, i32) {
    %c0_i32 = arith.constant 0 : i32
    %c0_i32_0 = arith.constant 0 : i32
    return %c0_i32, %arg1 : i32, i32
  }
  func.func @transform_2(%arg0: i32, %arg1: i32) -> (i32, i32) {
    %c0_i32 = arith.constant 0 : i32
    %c0_i32_0 = arith.constant 0 : i32
    return %c0_i32, %arg1 : i32, i32
  }
  func.func @transform_3(%arg0: i32, %arg1: i32) -> (i32, i32) {
    %c0_i32 = arith.constant 0 : i32
    return %arg0, %arg1 : i32, i32
  }
}

</mosaic_0001>

<llo_original>
// kernel: tpu_custom_call.1
$region0: #{tpu_custom_call.1}
  #allocation0 [shape = 'u32[]', space=smem, size = 0x4, offset = 0x4, fixed_abs, tag = 'smem constant byte address 0x4 - core index']
  #allocation1 [shape = 'u32[144,128]{1,0:T(1,128)}', space=vmem, size = 0x12000, scoped, tag = 'internal scratch']
  %s0 = inlined_call_operand.hbm [shape: bf16[1024,64], index: 0, kind: input, shape index: {}]
  %s1 = inlined_call_operand.hbm [shape: bf16[64,128], index: 1, kind: input, shape index: {}]
  %s2 = inlined_call_operand.hbm [shape: f32[1,128], index: 2, kind: input, shape index: {}]
  %s3 = inlined_call_operand.hbm [shape: bf16[1024,128], index: 3, kind: output, shape index: {}]
  %s4 = sld [smem:[#allocation0]]
  $region34: #{tpu_custom_call.1} parent=0
    _
  %s6 = ssub.s32 1, %s4
  %s7 = scalar_select 0, %s6, %s4
  $region1: #{tpu_custom_call.1} parent=0
    #allocation2 [shape = 'u8[262144]{0}', space=vmem, size = 0x40000, scoped, tag = 'input window, operand 0, single buffered']
    #allocation3 [shape = 's32[1]{0}', space=sflag, size = 0x4, scoped, tag = 'scoped memory for tpu_custom_call.1']
    #allocation4 [shape = 's32[1]{0}', space=sflag, size = 0x4, scoped, tag = 'scoped memory for tpu_custom_call.1']
    #allocation5 [shape = 'u8[16384]{0}', space=vmem, size = 0x4000, scoped, tag = 'input window, operand 1, single buffered']
    #allocation6 [shape = 's32[1]{0}', space=sflag, size = 0x4, scoped, tag = 'scoped memory for tpu_custom_call.1']
    #allocation7 [shape = 'u8[512]{0}', space=vmem, size = 0x400, scoped, tag = 'input window, operand 2, single buffered']
    #allocation8 [shape = 'u8[262144]{0}', space=vmem, size = 0x40000, scoped, tag = 'output window, operand 0, single buffered']
    %8 = vsyncpa [#allocation3], 0
    %9 = vsyncpa [#allocation6], 0
    %10 = vsyncpa [#allocation4], 0
    // Predicated region
    $region2: #{tpu_custom_call.1} parent=1 // pred_check
      _
    $region3: #{tpu_custom_call.1} parent=1 // pred_check_branch
      %12 = sbr.rel (0) target = $region5
    $region4: #{tpu_custom_call.1} parent=1 // pred_region
      %s14 = ssub.s32 8192, 8192
      %15 = vsyncadd [#allocation3], %s14
      %s16 = sshll.u32 [#allocation2], 4
      %s17 = int_to_ptr.vmem [resolvable:$true] %s16
      %22 = dma.hbm_to_vmem [thread:$0]  %s0, 8192, %s17, [#allocation3], 64, 64, 4
    $region5: #{tpu_custom_call.1} parent=1 // pred_fallthru
      _
    // Predicated region
    $region6: #{tpu_custom_call.1} parent=1 // pred_check
      _
    $region7: #{tpu_custom_call.1} parent=1 // pred_check_branch
      %24 = sbr.rel (0) target = $region9
    $region8: #{tpu_custom_call.1} parent=1 // pred_region
      %s26 = ssub.s32 512, 512
      %27 = vsyncadd [#allocation6], %s26
      %s28 = sshll.u32 [#allocation5], 4
      %s29 = int_to_ptr.vmem [resolvable:$true] %s28
      %34 = dma.hbm_to_vmem [thread:$0]  %s1, 512, %s29, [#allocation6], 64, 64, 4
    $region9: #{tpu_custom_call.1} parent=1 // pred_fallthru
      _
    // Predicated region
    $region10: #{tpu_custom_call.1} parent=1 // pred_check
      _
    $region11: #{tpu_custom_call.1} parent=1 // pred_check_branch
      %36 = sbr.rel (0) target = $region13
    $region12: #{tpu_custom_call.1} parent=1 // pred_region
      %s38 = ssub.s32 16, 16
      %39 = vsyncadd [#allocation6], %s38
      %s41 = sshll.u32 [#allocation7], 4
      %s42 = int_to_ptr.vmem [resolvable:$true] %s41
      %44 = dma.hbm_to_vmem [thread:$0]  %s2, 16, %s42, [#allocation6]
    $region13: #{tpu_custom_call.1} parent=1 // pred_fallthru
      _
    // Predicated region
    $region14: #{tpu_custom_call.1} parent=1 // pred_check
      _
    $region15: #{tpu_custom_call.1} parent=1 // pred_check_branch
      %46 = sbr.rel (0) target = $region17
    $region16: #{tpu_custom_call.1} parent=1 // pred_region
      %47 = dma.done [#allocation3], 8192
    $region17: #{tpu_custom_call.1} parent=1 // pred_fallthru
      _
    // Predicated region
    $region18: #{tpu_custom_call.1} parent=1 // pred_check
      _
    $region19: #{tpu_custom_call.1} parent=1 // pred_check_branch
      %49 = sbr.rel (0) target = $region21
    $region20: #{tpu_custom_call.1} parent=1 // pred_region
      %50 = dma.done [#allocation6], 512
    $region21: #{tpu_custom_call.1} parent=1 // pred_fallthru
      _
    // Predicated region
    $region22: #{tpu_custom_call.1} parent=1 // pred_check
      _
    $region23: #{tpu_custom_call.1} parent=1 // pred_check_branch
      %52 = sbr.rel (0) target = $region25
    $region24: #{tpu_custom_call.1} parent=1 // pred_region
      %53 = dma.done [#allocation6], 16
    $region25: #{tpu_custom_call.1} parent=1 // pred_fallthru
      _
    %v55 = vld [vmem:[#allocation2] sm:$0xf]
    %v56 = vld [vmem:[#allocation2 + $0x4] sm:$0xf]
    %v57 = vld [vmem:[#allocation2 + $0x8] sm:$0xf]
    %v58 = vld [vmem:[#allocation2 + $0xc] sm:$0xf]
    %v59 = vld [vmem:[#allocation2 + $0x10] sm:$0xf]
    %v60 = vld [vmem:[#allocation2 + $0x14] sm:$0xf]
    %v61 = vld [vmem:[#allocation2 + $0x18] sm:$0xf]
    %v62 = vld [vmem:[#allocation2 + $0x1c] sm:$0xf]
    %v63 = vld [vmem:[#allocation2 + $0x20] sm:$0xf]
    %v64 = vld [vmem:[#allocation2 + $0x24] sm:$0xf]
    %v65 = vld [vmem:[#allocation2 + $0x28] sm:$0xf]
    %v66 = vld [vmem:[#allocation2 + $0x2c] sm:$0xf]
    %v67 = vld [vmem:[#allocation2 + $0x30] sm:$0xf]
    %v68 = vld [vmem:[#allocation2 + $0x34] sm:$0xf]
    %v69 = vld [vmem:[#allocation2 + $0x38] sm:$0xf]
    %v70 = vld [vmem:[#allocation2 + $0x3c] sm:$0xf]
    %v71 = vld [vmem:[#allocation2 + $0x40] sm:$0xf]
    %v72 = vld [vmem:[#allocation2 + $0x44] sm:$0xf]
    %v73 = vld [vmem:[#allocation2 + $0x48] sm:$0xf]
    %v74 = vld [vmem:[#allocation2 + $0x4c] sm:$0xf]
    %v75 = vld [vmem:[#allocation2 + $0x50] sm:$0xf]
    %v76 = vld [vmem:[#allocation2 + $0x54] sm:$0xf]
    %v77 = vld [vmem:[#allocation2 + $0x58] sm:$0xf]
    %v78 = vld [vmem:[#allocation2 + $0x5c] sm:$0xf]
    %v79 = vld [vmem:[#allocation2 + $0x60] sm:$0xf]
    %v80 = vld [vmem:[#allocation2 + $0x64] sm:$0xf]
    %v81 = vld [vmem:[#allocation2 + $0x68] sm:$0xf]
    %v82 = vld [vmem:[#allocation2 + $0x6c] sm:$0xf]
    %v83 = vld [vmem:[#allocation2 + $0x70] sm:$0xf]
    %v84 = vld [vmem:[#allocation2 + $0x74] sm:$0xf]
    %v85 = vld [vmem:[#allocation2 + $0x78] sm:$0xf]
    %v86 = vld [vmem:[#allocation2 + $0x7c] sm:$0xf]
    %v87 = vld [vmem:[#allocation2 + $0x80] sm:$0xf]
    %v88 = vld [vmem:[#allocation2 + $0x84] sm:$0xf]
    %v89 = vld [vmem:[#allocation2 + $0x88] sm:$0xf]
    %v90 = vld [vmem:[#allocation2 + $0x8c] sm:$0xf]
    %v91 = vld [vmem:[#allocation2 + $0x90] sm:$0xf]
    %v92 = vld [vmem:[#allocation2 + $0x94] sm:$0xf]
    %v93 = vld [vmem:[#allocation2 + $0x98] sm:$0xf]
    %v94 = vld [vmem:[#allocation2 + $0x9c] sm:$0xf]
    %v95 = vld [vmem:[#allocation2 + $0xa0] sm:$0xf]
    %v96 = vld [vmem:[#allocation2 + $0xa4] sm:$0xf]
    %v97 = vld [vmem:[#allocation2 + $0xa8] sm:$0xf]
    %v98 = vld [vmem:[#allocation2 + $0xac] sm:$0xf]
    %v99 = vld [vmem:[#allocation2 + $0xb0] sm:$0xf]
    %v100 = vld [vmem:[#allocation2 + $0xb4] sm:$0xf]
    %v101 = vld [vmem:[#allocation2 + $0xb8] sm:$0xf]
    %v102 = vld [vmem:[#allocation2 + $0xbc] sm:$0xf]
    %v103 = vld [vmem:[#allocation2 + $0xc0] sm:$0xf]
    %v104 = vld [vmem:[#allocation2 + $0xc4] sm:$0xf]
    %v105 = vld [vmem:[#allocation2 + $0xc8] sm:$0xf]
    %v106 = vld [vmem:[#allocation2 + $0xcc] sm:$0xf]
    %v107 = vld [vmem:[#allocation2 + $0xd0] sm:$0xf]
    %v108 = vld [vmem:[#allocation2 + $0xd4] sm:$0xf]
    %v109 = vld [vmem:[#allocation2 + $0xd8] sm:$0xf]
    %v110 = vld [vmem:[#allocation2 + $0xdc] sm:$0xf]
    %v111 = vld [vmem:[#allocation2 + $0xe0] sm:$0xf]
    %v112 = vld [vmem:[#allocation2 + $0xe4] sm:$0xf]
    %v113 = vld [vmem:[#allocation2 + $0xe8] sm:$0xf]
    %v114 = vld [vmem:[#allocation2 + $0xec] sm:$0xf]
    %v115 = vld [vmem:[#allocation2 + $0xf0] sm:$0xf]
    %v116 = vld [vmem:[#allocation2 + $0xf4] sm:$0xf]
    %v117 = vld [vmem:[#allocation2 + $0xf8] sm:$0xf]
    %v118 = vld [vmem:[#allocation2 + $0xfc] sm:$0xf]
    %v119 = vld [vmem:[#allocation2 + $0x100] sm:$0xf]
    %v120 = vld [vmem:[#allocation2 + $0x104] sm:$0xf]
    %v121 = vld [vmem:[#allocation2 + $0x108] sm:$0xf]
    %v122 = vld [vmem:[#allocation2 + $0x10c] sm:$0xf]
    %v123 = vld [vmem:[#allocation2 + $0x110] sm:$0xf]
    %v124 = vld [vmem:[#allocation2 + $0x114] sm:$0xf]
    %v125 = vld [vmem:[#allocation2 + $0x118] sm:$0xf]
    %v126 = vld [vmem:[#allocation2 + $0x11c] sm:$0xf]
    %v127 = vld [vmem:[#allocation2 + $0x120] sm:$0xf]
    %v128 = vld [vmem:[#allocation2 + $0x124] sm:$0xf]
    %v129 = vld [vmem:[#allocation2 + $0x128] sm:$0xf]
    %v130 = vld [vmem:[#allocation2 + $0x12c] sm:$0xf]
    %v131 = vld [vmem:[#allocation2 + $0x130] sm:$0xf]
    %v132 = vld [vmem:[#allocation2 + $0x134] sm:$0xf]
    %v133 = vld [vmem:[#allocation2 + $0x138] sm:$0xf]
    %v134 = vld [vmem:[#allocation2 + $0x13c] sm:$0xf]
    %v135 = vld [vmem:[#allocation2 + $0x140] sm:$0xf]
    %v136 = vld [vmem:[#allocation2 + $0x144] sm:$0xf]
    %v137 = vld [vmem:[#allocation2 + $0x148] sm:$0xf]
    %v138 = vld [vmem:[#allocation2 + $0x14c] sm:$0xf]
    %v139 = vld [vmem:[#allocation2 + $0x150] sm:$0xf]
    %v140 = vld [vmem:[#allocation2 + $0x154] sm:$0xf]
    %v141 = vld [vmem:[#allocation2 + $0x158] sm:$0xf]
    %v142 = vld [vmem:[#allocation2 + $0x15c] sm:$0xf]
    %v143 = vld [vmem:[#allocation2 + $0x160] sm:$0xf]
    %v144 = vld [vmem:[#allocation2 + $0x164] sm:$0xf]
    %v145 = vld [vmem:[#allocation2 + $0x168] sm:$0xf]
    %v146 = vld [vmem:[#allocation2 + $0x16c] sm:$0xf]
    %v147 = vld [vmem:[#allocation2 + $0x170] sm:$0xf]
    %v148 = vld [vmem:[#allocation2 + $0x174] sm:$0xf]
    %v149 = vld [vmem:[#allocation2 + $0x178] sm:$0xf]
    %v150 = vld [vmem:[#allocation2 + $0x17c] sm:$0xf]
    %v151 = vld [vmem:[#allocation2 + $0x180] sm:$0xf]
    %v152 = vld [vmem:[#allocation2 + $0x184] sm:$0xf]
    %v153 = vld [vmem:[#allocation2 + $0x188] sm:$0xf]
    %v154 = vld [vmem:[#allocation2 + $0x18c] sm:$0xf]
    %v155 = vld [vmem:[#allocation2 + $0x190] sm:$0xf]
    %v156 = vld [vmem:[#allocation2 + $0x194] sm:$0xf]
    %v157 = vld [vmem:[#allocation2 + $0x198] sm:$0xf]
    %v158 = vld [vmem:[#allocation2 + $0x19c] sm:$0xf]
    %v159 = vld [vmem:[#allocation2 + $0x1a0] sm:$0xf]
    %v160 = vld [vmem:[#allocation2 + $0x1a4] sm:$0xf]
    %v161 = vld [vmem:[#allocation2 + $0x1a8] sm:$0xf]
    %v162 = vld [vmem:[#allocation2 + $0x1ac] sm:$0xf]
    %v163 = vld [vmem:[#allocation2 + $0x1b0] sm:$0xf]
    %v164 = vld [vmem:[#allocation2 + $0x1b4] sm:$0xf]
    %v165 = vld [vmem:[#allocation2 + $0x1b8] sm:$0xf]
    %v166 = vld [vmem:[#allocation2 + $0x1bc] sm:$0xf]
    %v167 = vld [vmem:[#allocation2 + $0x1c0] sm:$0xf]
    %v168 = vld [vmem:[#allocation2 + $0x1c4] sm:$0xf]
    %v169 = vld [vmem:[#allocation2 + $0x1c8] sm:$0xf]
    %v170 = vld [vmem:[#allocation2 + $0x1cc] sm:$0xf]
    %v171 = vld [vmem:[#allocation2 + $0x1d0] sm:$0xf]
    %v172 = vld [vmem:[#allocation2 + $0x1d4] sm:$0xf]
    %v173 = vld [vmem:[#allocation2 + $0x1d8] sm:$0xf]
    %v174 = vld [vmem:[#allocation2 + $0x1dc] sm:$0xf]
    %v175 = vld [vmem:[#allocation2 + $0x1e0] sm:$0xf]
    %v176 = vld [vmem:[#allocation2 + $0x1e4] sm:$0xf]
    %v177 = vld [vmem:[#allocation2 + $0x1e8] sm:$0xf]
    %v178 = vld [vmem:[#allocation2 + $0x1ec] sm:$0xf]
    %v179 = vld [vmem:[#allocation2 + $0x1f0] sm:$0xf]
    %v180 = vld [vmem:[#allocation2 + $0x1f4] sm:$0xf]
    %v181 = vld [vmem:[#allocation2 + $0x1f8] sm:$0xf]
    %v182 = vld [vmem:[#allocation2 + $0x1fc] sm:$0xf]
    %v183 = vld [vmem:[#allocation5] sm:$0xf]
    %v184 = vld [vmem:[#allocation5 + $0x4] sm:$0xf]
    %v185 = vld [vmem:[#allocation5 + $0x8] sm:$0xf]
    %v186 = vld [vmem:[#allocation5 + $0xc] sm:$0xf]
    %v187 = vld [vmem:[#allocation5 + $0x10] sm:$0xf]
    %v188 = vld [vmem:[#allocation5 + $0x14] sm:$0xf]
    %v189 = vld [vmem:[#allocation5 + $0x18] sm:$0xf]
    %v190 = vld [vmem:[#allocation5 + $0x1c] sm:$0xf]
    %v191 = vld [vmem:[#allocation7] sm:$0x1]
    %v193 = vlaneseq
    %v194 = vshrl.u32 %v193, 7
    %v195 = vsub.s32 0, %v194
    %v196 = vrot.slane %v191, %v195
    %v326 = vunpack.c.l.b16 %v55
    %v327 = vunpack.c.l.b16 %v56
    %v328 = vunpack.c.l.b16 %v57
    %v329 = vunpack.c.l.b16 %v58
    %v330 = vunpack.c.l.b16 %v59
    %v331 = vunpack.c.l.b16 %v60
    %v332 = vunpack.c.l.b16 %v61
    %v333 = vunpack.c.l.b16 %v62
    %v334 = vunpack.c.l.b16 %v63
    %v335 = vunpack.c.l.b16 %v64
    %v336 = vunpack.c.l.b16 %v65
    %v337 = vunpack.c.l.b16 %v66
    %v338 = vunpack.c.l.b16 %v67
    %v339 = vunpack.c.l.b16 %v68
    %v340 = vunpack.c.l.b16 %v69
    %v341 = vunpack.c.l.b16 %v70
    %v342 = vunpack.c.l.b16 %v71
    %v343 = vunpack.c.l.b16 %v72
    %v344 = vunpack.c.l.b16 %v73
    %v345 = vunpack.c.l.b16 %v74
    %v346 = vunpack.c.l.b16 %v75
    %v347 = vunpack.c.l.b16 %v76
    %v348 = vunpack.c.l.b16 %v77
    %v349 = vunpack.c.l.b16 %v78
    %v350 = vunpack.c.l.b16 %v79
    %v351 = vunpack.c.l.b16 %v80
    %v352 = vunpack.c.l.b16 %v81
    %v353 = vunpack.c.l.b16 %v82
    %v354 = vunpack.c.l.b16 %v83
    %v355 = vunpack.c.l.b16 %v84
    %v356 = vunpack.c.l.b16 %v85
    %v357 = vunpack.c.l.b16 %v86
    %v358 = vunpack.c.l.b16 %v87
    %v359 = vunpack.c.l.b16 %v88
    %v360 = vunpack.c.l.b16 %v89
    %v361 = vunpack.c.l.b16 %v90
    %v362 = vunpack.c.l.b16 %v91
    %v363 = vunpack.c.l.b16 %v92
    %v364 = vunpack.c.l.b16 %v93
    %v365 = vunpack.c.l.b16 %v94
    %v366 = vunpack.c.l.b16 %v95
    %v367 = vunpack.c.l.b16 %v96
    %v368 = vunpack.c.l.b16 %v97
    %v369 = vunpack.c.l.b16 %v98
    %v370 = vunpack.c.l.b16 %v99
    %v371 = vunpack.c.l.b16 %v100
    %v372 = vunpack.c.l.b16 %v101
    %v373 = vunpack.c.l.b16 %v102
    %v374 = vunpack.c.l.b16 %v103
    %v375 = vunpack.c.l.b16 %v104
    %v376 = vunpack.c.l.b16 %v105
    %v377 = vunpack.c.l.b16 %v106
    %v378 = vunpack.c.l.b16 %v107
    %v379 = vunpack.c.l.b16 %v108
    %v380 = vunpack.c.l.b16 %v109
    %v381 = vunpack.c.l.b16 %v110
    %v382 = vunpack.c.l.b16 %v111
    %v383 = vunpack.c.l.b16 %v112
    %v384 = vunpack.c.l.b16 %v113
    %v385 = vunpack.c.l.b16 %v114
    %v386 = vunpack.c.l.b16 %v115
    %v387 = vunpack.c.l.b16 %v116
    %v388 = vunpack.c.l.b16 %v117
    %v389 = vunpack.c.l.b16 %v118
    %v390 = vunpack.c.l.b16 %v119
    %v391 = vunpack.c.l.b16 %v120
    %v392 = vunpack.c.l.b16 %v121
    %v393 = vunpack.c.l.b16 %v122
    %v394 = vunpack.c.l.b16 %v123
    %v395 = vunpack.c.l.b16 %v124
    %v396 = vunpack.c.l.b16 %v125
    %v397 = vunpack.c.l.b16 %v126
    %v398 = vunpack.c.l.b16 %v127
    %v399 = vunpack.c.l.b16 %v128
    %v400 = vunpack.c.l.b16 %v129
    %v401 = vunpack.c.l.b16 %v130
    %v402 = vunpack.c.l.b16 %v131
    %v403 = vunpack.c.l.b16 %v132
    %v404 = vunpack.c.l.b16 %v133
    %v405 = vunpack.c.l.b16 %v134
    %v406 = vunpack.c.l.b16 %v135
    %v407 = vunpack.c.l.b16 %v136
    %v408 = vunpack.c.l.b16 %v137
    %v409 = vunpack.c.l.b16 %v138
    %v410 = vunpack.c.l.b16 %v139
    %v411 = vunpack.c.l.b16 %v140
    %v412 = vunpack.c.l.b16 %v141
    %v413 = vunpack.c.l.b16 %v142
    %v414 = vunpack.c.l.b16 %v143
    %v415 = vunpack.c.l.b16 %v144
    %v416 = vunpack.c.l.b16 %v145
    %v417 = vunpack.c.l.b16 %v146
    %v418 = vunpack.c.l.b16 %v147
    %v419 = vunpack.c.l.b16 %v148
    %v420 = vunpack.c.l.b16 %v149
    %v421 = vunpack.c.l.b16 %v150
    %v422 = vunpack.c.l.b16 %v151
    %v423 = vunpack.c.l.b16 %v152
    %v424 = vunpack.c.l.b16 %v153
    %v425 = vunpack.c.l.b16 %v154
    %v426 = vunpack.c.l.b16 %v155
    %v427 = vunpack.c.l.b16 %v156
    %v428 = vunpack.c.l.b16 %v157
    %v429 = vunpack.c.l.b16 %v158
    %v430 = vunpack.c.l.b16 %v159
    %v431 = vunpack.c.l.b16 %v160
    %v432 = vunpack.c.l.b16 %v161
    %v433 = vunpack.c.l.b16 %v162
    %v434 = vunpack.c.l.b16 %v163
    %v435 = vunpack.c.l.b16 %v164
    %v436 = vunpack.c.l.b16 %v165
    %v437 = vunpack.c.l.b16 %v166
    %v438 = vunpack.c.l.b16 %v167
    %v439 = vunpack.c.l.b16 %v168
    %v440 = vunpack.c.l.b16 %v169
    %v441 = vunpack.c.l.b16 %v170
    %v442 = vunpack.c.l.b16 %v171
    %v443 = vunpack.c.l.b16 %v172
    %v444 = vunpack.c.l.b16 %v173
    %v445 = vunpack.c.l.b16 %v174
    %v446 = vunpack.c.l.b16 %v175
    %v447 = vunpack.c.l.b16 %v176
    %v448 = vunpack.c.l.b16 %v177
    %v449 = vunpack.c.l.b16 %v178
    %v450 = vunpack.c.l.b16 %v179
    %v451 = vunpack.c.l.b16 %v180
    %v452 = vunpack.c.l.b16 %v181
    %v453 = vunpack.c.l.b16 %v182
    %v454 = vpack.c.b16 %v327, %v326
    %v455 = vpack.c.b16 %v329, %v328
    %v456 = vpack.c.b16 %v331, %v330
    %v457 = vpack.c.b16 %v333, %v332
    %v458 = vpack.c.b16 %v335, %v334
    %v459 = vpack.c.b16 %v337, %v336
    %v460 = vpack.c.b16 %v339, %v338
    %v461 = vpack.c.b16 %v341, %v340
    %v462 = vpack.c.b16 %v343, %v342
    %v463 = vpack.c.b16 %v345, %v344
    %v464 = vpack.c.b16 %v347, %v346
    %v465 = vpack.c.b16 %v349, %v348
    %v466 = vpack.c.b16 %v351, %v350
    %v467 = vpack.c.b16 %v353, %v352
    %v468 = vpack.c.b16 %v355, %v354
    %v469 = vpack.c.b16 %v357, %v356
    %v470 = vpack.c.b16 %v359, %v358
    %v471 = vpack.c.b16 %v361, %v360
    %v472 = vpack.c.b16 %v363, %v362
    %v473 = vpack.c.b16 %v365, %v364
    %v474 = vpack.c.b16 %v367, %v366
    %v475 = vpack.c.b16 %v369, %v368
    %v476 = vpack.c.b16 %v371, %v370
    %v477 = vpack.c.b16 %v373, %v372
    %v478 = vpack.c.b16 %v375, %v374
    %v479 = vpack.c.b16 %v377, %v376
    %v480 = vpack.c.b16 %v379, %v378
    %v481 = vpack.c.b16 %v381, %v380
    %v482 = vpack.c.b16 %v383, %v382
    %v483 = vpack.c.b16 %v385, %v384
    %v484 = vpack.c.b16 %v387, %v386
    %v485 = vpack.c.b16 %v389, %v388
    %v486 = vpack.c.b16 %v391, %v390
    %v487 = vpack.c.b16 %v393, %v392
    %v488 = vpack.c.b16 %v395, %v394
    %v489 = vpack.c.b16 %v397, %v396
    %v490 = vpack.c.b16 %v399, %v398
    %v491 = vpack.c.b16 %v401, %v400
    %v492 = vpack.c.b16 %v403, %v402
    %v493 = vpack.c.b16 %v405, %v404
    %v494 = vpack.c.b16 %v407, %v406
    %v495 = vpack.c.b16 %v409, %v408
    %v496 = vpack.c.b16 %v411, %v410
    %v497 = vpack.c.b16 %v413, %v412
    %v498 = vpack.c.b16 %v415, %v414
    %v499 = vpack.c.b16 %v417, %v416
    %v500 = vpack.c.b16 %v419, %v418
    %v501 = vpack.c.b16 %v421, %v420
    %v502 = vpack.c.b16 %v423, %v422
    %v503 = vpack.c.b16 %v425, %v424
    %v504 = vpack.c.b16 %v427, %v426
    %v505 = vpack.c.b16 %v429, %v428
    %v506 = vpack.c.b16 %v431, %v430
    %v507 = vpack.c.b16 %v433, %v432
    %v508 = vpack.c.b16 %v435, %v434
    %v509 = vpack.c.b16 %v437, %v436
    %v510 = vpack.c.b16 %v439, %v438
    %v511 = vpack.c.b16 %v441, %v440
    %v512 = vpack.c.b16 %v443, %v442
    %v513 = vpack.c.b16 %v445, %v444
    %v514 = vpack.c.b16 %v447, %v446
    %v515 = vpack.c.b16 %v449, %v448
    %v516 = vpack.c.b16 %v451, %v450
    %v517 = vpack.c.b16 %v453, %v452
    %v526 = vunpack.c.l.b16 %v183
    %v527 = vunpack.c.l.b16 %v184
    %v528 = vunpack.c.l.b16 %v185
    %v529 = vunpack.c.l.b16 %v186
    %v530 = vunpack.c.l.b16 %v187
    %v531 = vunpack.c.l.b16 %v188
    %v532 = vunpack.c.l.b16 %v189
    %v533 = vunpack.c.l.b16 %v190
    %v534 = vpack.c.b16 %v527, %v526
    %v535 = vpack.c.b16 %v529, %v528
    %v536 = vpack.c.b16 %v531, %v530
    %v537 = vpack.c.b16 %v533, %v532
    %vm542 = vcmask 523264
    %v544 = vsel %vm542, %v454, 0
    %v547 = vsel %vm542, %v455, 0
    %v550 = vsel %vm542, %v456, 0
    %v553 = vsel %vm542, %v457, 0
    %v556 = vsel %vm542, %v458, 0
    %v559 = vsel %vm542, %v459, 0
    %v562 = vsel %vm542, %v460, 0
    %v565 = vsel %vm542, %v461, 0
    %v568 = vsel %vm542, %v462, 0
    %v571 = vsel %vm542, %v463, 0
    %v574 = vsel %vm542, %v464, 0
    %v577 = vsel %vm542, %v465, 0
    %v580 = vsel %vm542, %v466, 0
    %v583 = vsel %vm542, %v467, 0
    %v586 = vsel %vm542, %v468, 0
    %v589 = vsel %vm542, %v469, 0
    %v592 = vsel %vm542, %v470, 0
    %v595 = vsel %vm542, %v471, 0
    %v598 = vsel %vm542, %v472, 0
    %v601 = vsel %vm542, %v473, 0
    %v604 = vsel %vm542, %v474, 0
    %v607 = vsel %vm542, %v475, 0
    %v610 = vsel %vm542, %v476, 0
    %v613 = vsel %vm542, %v477, 0
    %v616 = vsel %vm542, %v478, 0
    %v619 = vsel %vm542, %v479, 0
    %v622 = vsel %vm542, %v480, 0
    %v625 = vsel %vm542, %v481, 0
    %v628 = vsel %vm542, %v482, 0
    %v631 = vsel %vm542, %v483, 0
    %v634 = vsel %vm542, %v484, 0
    %v637 = vsel %vm542, %v485, 0
    %v640 = vsel %vm542, %v486, 0
    %v643 = vsel %vm542, %v487, 0
    %v646 = vsel %vm542, %v488, 0
    %v649 = vsel %vm542, %v489, 0
    %v652 = vsel %vm542, %v490, 0
    %v655 = vsel %vm542, %v491, 0
    %v658 = vsel %vm542, %v492, 0
    %v661 = vsel %vm542, %v493, 0
    %v664 = vsel %vm542, %v494, 0
    %v667 = vsel %vm542, %v495, 0
    %v670 = vsel %vm542, %v496, 0
    %v673 = vsel %vm542, %v497, 0
    %v676 = vsel %vm542, %v498, 0
    %v679 = vsel %vm542, %v499, 0
    %v682 = vsel %vm542, %v500, 0
    %v685 = vsel %vm542, %v501, 0
    %v688 = vsel %vm542, %v502, 0
    %v691 = vsel %vm542, %v503, 0
    %v694 = vsel %vm542, %v504, 0
    %v697 = vsel %vm542, %v505, 0
    %v700 = vsel %vm542, %v506, 0
    %v703 = vsel %vm542, %v507, 0
    %v706 = vsel %vm542, %v508, 0
    %v709 = vsel %vm542, %v509, 0
    %v712 = vsel %vm542, %v510, 0
    %v715 = vsel %vm542, %v511, 0
    %v718 = vsel %vm542, %v512, 0
    %v721 = vsel %vm542, %v513, 0
    %v724 = vsel %vm542, %v514, 0
    %v727 = vsel %vm542, %v515, 0
    %v730 = vsel %vm542, %v516, 0
    %v733 = vsel %vm542, %v517, 0
    %735 = vmatprep.subr.bf16.mxu0 0
    %736 = vmatpush1.bf16.msra.mxu0 %v534
    %737 = vmatprep.subr.bf16.mxu0 0
    %738 = vmatpush1.bf16.msra.mxu0 %v535
    %739 = vmatprep.subr.bf16.mxu0 0
    %740 = vmatpush1.bf16.msra.mxu0 %v536
    %741 = vmatprep.subr.bf16.mxu0 0
    %742 = vmatpush1.bf16.msra.mxu0 %v537
    %743 = vmatprep.subr.bf16.mxu0 0
    %744 = vmatpush1.bf16.msra.mxu0 0
    %745 = vmatprep.subr.bf16.mxu0 0
    %746 = vmatpush1.bf16.msra.mxu0 0
    %747 = vmatprep.subr.bf16.mxu0 0
    %748 = vmatpush1.bf16.msra.mxu0 0
    %749 = vmatprep.subr.bf16.mxu0 0
    %750 = vmatpush1.bf16.msra.mxu0 0
    %751 = vmatprep.subr.bf16.mxu0 0
    %752 = vmatpush1.bf16.msra.mxu0 0
    %753 = vmatprep.subr.bf16.mxu0 0
    %754 = vmatpush1.bf16.msra.mxu0 0
    %755 = vmatprep.subr.bf16.mxu0 0
    %756 = vmatpush1.bf16.msra.mxu0 0
    %757 = vmatprep.subr.bf16.mxu0 0
    %758 = vmatpush1.bf16.msra.mxu0 0
    %759 = vmatprep.subr.bf16.mxu0 0
    %760 = vmatpush1.bf16.msra.mxu0 0
    %761 = vmatprep.subr.bf16.mxu0 0
    %762 = vmatpush1.bf16.msra.mxu0 0
    %763 = vmatprep.subr.bf16.mxu0 0
    %764 = vmatpush1.bf16.msra.mxu0 0
    %765 = vmatprep.subr.bf16.mxu0 0
    %766 = vmatpush1.bf16.msra.mxu0 0
    %767 = vmatprep.mubr.bf16.mxu0 0
    %768 = vmatmul.mubr.bf16.gmra.mrb[0].mxu0 %v544
    %v769 = vpop.f32.mrb[0].mxu0
    %v770 = vadd.f32 %v196, %v769
    %v771 = vpop.f32.mrb[0].mxu0
    %v772 = vpop.f32.mrb[0].mxu0
    %v773 = vadd.f32 %v196, %v772
    %v774 = vpop.f32.mrb[0].mxu0
    %775 = vmatprep.mubr.bf16.mxu0 0
    %776 = vmatmul.mubr.bf16.gmra.mrb[0].mxu0 %v547
    %v777 = vpop.f32.mrb[0].mxu0
    %v778 = vadd.f32 %v196, %v777
    %v779 = vpop.f32.mrb[0].mxu0
    %v780 = vpop.f32.mrb[0].mxu0
    %v781 = vadd.f32 %v196, %v780
    %v782 = vpop.f32.mrb[0].mxu0
    %783 = vmatprep.mubr.bf16.mxu0 0
    %784 = vmatmul.mubr.bf16.gmra.mrb[0].mxu0 %v550
    %v785 = vpop.f32.mrb[0].mxu0
    %v786 = vadd.f32 %v196, %v785
    %v787 = vpop.f32.mrb[0].mxu0
    %v788 = vpop.f32.mrb[0].mxu0
    %v789 = vadd.f32 %v196, %v788
    %v790 = vpop.f32.mrb[0].mxu0
    %791 = vmatprep.mubr.bf16.mxu0 0
    %792 = vmatmul.mubr.bf16.gmra.mrb[0].mxu0 %v553
    %v793 = vpop.f32.mrb[0].mxu0
    %v794 = vadd.f32 %v196, %v793
    %v795 = vpop.f32.mrb[0].mxu0
    %v796 = vpop.f32.mrb[0].mxu0
    %v797 = vadd.f32 %v196, %v796
    %v798 = vpop.f32.mrb[0].mxu0
    %799 = vmatprep.mubr.bf16.mxu0 0
    %800 = vmatmul.mubr.bf16.gmra.mrb[0].mxu0 %v556
    %v801 = vpop.f32.mrb[0].mxu0
    %v802 = vadd.f32 %v196, %v801
    %v803 = vpop.f32.mrb[0].mxu0
    %v804 = vpop.f32.mrb[0].mxu0
    %v805 = vadd.f32 %v196, %v804
    %v806 = vpop.f32.mrb[0].mxu0
    %807 = vmatprep.mubr.bf16.mxu0 0
    %808 = vmatmul.mubr.bf16.gmra.mrb[0].mxu0 %v559
    %v809 = vpop.f32.mrb[0].mxu0
    %v810 = vadd.f32 %v196, %v809
    %v811 = vpop.f32.mrb[0].mxu0
    %v812 = vpop.f32.mrb[0].mxu0
    %v813 = vadd.f32 %v196, %v812
    %v814 = vpop.f32.mrb[0].mxu0
    %815 = vmatprep.mubr.bf16.mxu0 0
    %816 = vmatmul.mubr.bf16.gmra.mrb[0].mxu0 %v562
    %v817 = vpop.f32.mrb[0].mxu0
    %v818 = vadd.f32 %v196, %v817
    %v819 = vpop.f32.mrb[0].mxu0
    %v820 = vpop.f32.mrb[0].mxu0
    %v821 = vadd.f32 %v196, %v820
    %v822 = vpop.f32.mrb[0].mxu0
    %823 = vmatprep.mubr.bf16.mxu0 0
    %824 = vmatmul.mubr.bf16.gmra.mrb[0].mxu0 %v565
    %v825 = vpop.f32.mrb[0].mxu0
    %v826 = vadd.f32 %v196, %v825
    %v827 = vpop.f32.mrb[0].mxu0
    %v828 = vpop.f32.mrb[0].mxu0
    %v829 = vadd.f32 %v196, %v828
    %v830 = vpop.f32.mrb[0].mxu0
    %831 = vmatprep.mubr.bf16.mxu0 0
    %832 = vmatmul.mubr.bf16.gmra.mrb[0].mxu0 %v568
    %v833 = vpop.f32.mrb[0].mxu0
    %v834 = vadd.f32 %v196, %v833
    %v835 = vpop.f32.mrb[0].mxu0
    %v836 = vpop.f32.mrb[0].mxu0
    %v837 = vadd.f32 %v196, %v836
    %v838 = vpop.f32.mrb[0].mxu0
    %839 = vmatprep.mubr.bf16.mxu0 0
    %840 = vmatmul.mubr.bf16.gmra.mrb[0].mxu0 %v571
    %v841 = vpop.f32.mrb[0].mxu0
    %v842 = vadd.f32 %v196, %v841
    %v843 = vpop.f32.mrb[0].mxu0
    %v844 = vpop.f32.mrb[0].mxu0
    %v845 = vadd.f32 %v196, %v844
    %v846 = vpop.f32.mrb[0].mxu0
    %847 = vmatprep.mubr.bf16.mxu0 0
    %848 = vmatmul.mubr.bf16.gmra.mrb[0].mxu0 %v574
    %v849 = vpop.f32.mrb[0].mxu0
    %v850 = vadd.f32 %v196, %v849
    %v851 = vpop.f32.mrb[0].mxu0
    %v852 = vpop.f32.mrb[0].mxu0
    %v853 = vadd.f32 %v196, %v852
    %v854 = vpop.f32.mrb[0].mxu0
    %855 = vmatprep.mubr.bf16.mxu0 0
    %856 = vmatmul.mubr.bf16.gmra.mrb[0].mxu0 %v577
    %v857 = vpop.f32.mrb[0].mxu0
    %v858 = vadd.f32 %v196, %v857
    %v859 = vpop.f32.mrb[0].mxu0
    %v860 = vpop.f32.mrb[0].mxu0
    %v861 = vadd.f32 %v196, %v860
    %v862 = vpop.f32.mrb[0].mxu0
    %863 = vmatprep.mubr.bf16.mxu0 0
    %864 = vmatmul.mubr.bf16.gmra.mrb[0].mxu0 %v580
    %v865 = vpop.f32.mrb[0].mxu0
    %v866 = vadd.f32 %v196, %v865
    %v867 = vpop.f32.mrb[0].mxu0
    %v868 = vpop.f32.mrb[0].mxu0
    %v869 = vadd.f32 %v196, %v868
    %v870 = vpop.f32.mrb[0].mxu0
    %871 = vmatprep.mubr.bf16.mxu0 0
    %872 = vmatmul.mubr.bf16.gmra.mrb[0].mxu0 %v583
    %v873 = vpop.f32.mrb[0].mxu0
    %v874 = vadd.f32 %v196, %v873
    %v875 = vpop.f32.mrb[0].mxu0
    %v876 = vpop.f32.mrb[0].mxu0
    %v877 = vadd.f32 %v196, %v876
    %v878 = vpop.f32.mrb[0].mxu0
    %879 = vmatprep.mubr.bf16.mxu0 0
    %880 = vmatmul.mubr.bf16.gmra.mrb[0].mxu0 %v586
    %v881 = vpop.f32.mrb[0].mxu0
    %v882 = vadd.f32 %v196, %v881
    %v883 = vpop.f32.mrb[0].mxu0
    %v884 = vpop.f32.mrb[0].mxu0
    %v885 = vadd.f32 %v196, %v884
    %v886 = vpop.f32.mrb[0].mxu0
    %887 = vmatprep.mubr.bf16.mxu0 0
    %888 = vmatmul.mubr.bf16.gmra.mrb[0].mxu0 %v589
    %v889 = vpop.f32.mrb[0].mxu0
    %v890 = vadd.f32 %v196, %v889
    %v891 = vpop.f32.mrb[0].mxu0
    %v892 = vpop.f32.mrb[0].mxu0
    %v893 = vadd.f32 %v196, %v892
    %v894 = vpop.f32.mrb[0].mxu0
    %895 = vmatprep.mubr.bf16.mxu0 0
    %896 = vmatmul.mubr.bf16.gmra.mrb[0].mxu0 %v592
    %v897 = vpop.f32.mrb[0].mxu0
    %v898 = vadd.f32 %v196, %v897
    %v899 = vpop.f32.mrb[0].mxu0
    %v900 = vpop.f32.mrb[0].mxu0
    %v901 = vadd.f32 %v196, %v900
    %v902 = vpop.f32.mrb[0].mxu0
    %903 = vmatprep.mubr.bf16.mxu0 0
    %904 = vmatmul.mubr.bf16.gmra.mrb[0].mxu0 %v595
    %v905 = vpop.f32.mrb[0].mxu0
    %v906 = vadd.f32 %v196, %v905
    %v907 = vpop.f32.mrb[0].mxu0
    %v908 = vpop.f32.mrb[0].mxu0
    %v909 = vadd.f32 %v196, %v908
    %v910 = vpop.f32.mrb[0].mxu0
    %911 = vmatprep.mubr.bf16.mxu0 0
    %912 = vmatmul.mubr.bf16.gmra.mrb[0].mxu0 %v598
    %v913 = vpop.f32.mrb[0].mxu0
    %v914 = vadd.f32 %v196, %v913
    %v915 = vpop.f32.mrb[0].mxu0
    %v916 = vpop.f32.mrb[0].mxu0
    %v917 = vadd.f32 %v196, %v916
    %v918 = vpop.f32.mrb[0].mxu0
    %919 = vmatprep.mubr.bf16.mxu0 0
    %920 = vmatmul.mubr.bf16.gmra.mrb[0].mxu0 %v601
    %v921 = vpop.f32.mrb[0].mxu0
    %v922 = vadd.f32 %v196, %v921
    %v923 = vpop.f32.mrb[0].mxu0
    %v924 = vpop.f32.mrb[0].mxu0
    %v925 = vadd.f32 %v196, %v924
    %v926 = vpop.f32.mrb[0].mxu0
    %927 = vmatprep.mubr.bf16.mxu0 0
    %928 = vmatmul.mubr.bf16.gmra.mrb[0].mxu0 %v604
    %v929 = vpop.f32.mrb[0].mxu0
    %v930 = vadd.f32 %v196, %v929
    %v931 = vpop.f32.mrb[0].mxu0
    %v932 = vpop.f32.mrb[0].mxu0
    %v933 = vadd.f32 %v196, %v932
    %v934 = vpop.f32.mrb[0].mxu0
    %935 = vmatprep.mubr.bf16.mxu0 0
    %936 = vmatmul.mubr.bf16.gmra.mrb[0].mxu0 %v607
    %v937 = vpop.f32.mrb[0].mxu0
    %v938 = vadd.f32 %v196, %v937
    %v939 = vpop.f32.mrb[0].mxu0
    %v940 = vpop.f32.mrb[0].mxu0
    %v941 = vadd.f32 %v196, %v940
    %v942 = vpop.f32.mrb[0].mxu0
    %943 = vmatprep.mubr.bf16.mxu0 0
    %944 = vmatmul.mubr.bf16.gmra.mrb[0].mxu0 %v610
    %v945 = vpop.f32.mrb[0].mxu0
    %v946 = vadd.f32 %v196, %v945
    %v947 = vpop.f32.mrb[0].mxu0
    %v948 = vpop.f32.mrb[0].mxu0
    %v949 = vadd.f32 %v196, %v948
    %v950 = vpop.f32.mrb[0].mxu0
    %951 = vmatprep.mubr.bf16.mxu0 0
    %952 = vmatmul.mubr.bf16.gmra.mrb[0].mxu0 %v613
    %v953 = vpop.f32.mrb[0].mxu0
    %v954 = vadd.f32 %v196, %v953
    %v955 = vpop.f32.mrb[0].mxu0
    %v956 = vpop.f32.mrb[0].mxu0
    %v957 = vadd.f32 %v196, %v956
    %v958 = vpop.f32.mrb[0].mxu0
    %959 = vmatprep.mubr.bf16.mxu0 0
    %960 = vmatmul.mubr.bf16.gmra.mrb[0].mxu0 %v616
    %v961 = vpop.f32.mrb[0].mxu0
    %v962 = vadd.f32 %v196, %v961
    %v963 = vpop.f32.mrb[0].mxu0
    %v964 = vpop.f32.mrb[0].mxu0
    %v965 = vadd.f32 %v196, %v964
    %v966 = vpop.f32.mrb[0].mxu0
    %967 = vmatprep.mubr.bf16.mxu0 0
    %968 = vmatmul.mubr.bf16.gmra.mrb[0].mxu0 %v619
    %v969 = vpop.f32.mrb[0].mxu0
    %v970 = vadd.f32 %v196, %v969
    %v971 = vpop.f32.mrb[0].mxu0
    %v972 = vpop.f32.mrb[0].mxu0
    %v973 = vadd.f32 %v196, %v972
    %v974 = vpop.f32.mrb[0].mxu0
    %975 = vmatprep.mubr.bf16.mxu0 0
    %976 = vmatmul.mubr.bf16.gmra.mrb[0].mxu0 %v622
    %v977 = vpop.f32.mrb[0].mxu0
    %v978 = vadd.f32 %v196, %v977
    %v979 = vpop.f32.mrb[0].mxu0
    %v980 = vpop.f32.mrb[0].mxu0
    %v981 = vadd.f32 %v196, %v980
    %v982 = vpop.f32.mrb[0].mxu0
    %983 = vmatprep.mubr.bf16.mxu0 0
    %984 = vmatmul.mubr.bf16.gmra.mrb[0].mxu0 %v625
    %v985 = vpop.f32.mrb[0].mxu0
    %v986 = vadd.f32 %v196, %v985
    %v987 = vpop.f32.mrb[0].mxu0
    %v988 = vpop.f32.mrb[0].mxu0
    %v989 = vadd.f32 %v196, %v988
    %v990 = vpop.f32.mrb[0].mxu0
    %991 = vmatprep.mubr.bf16.mxu0 0
    %992 = vmatmul.mubr.bf16.gmra.mrb[0].mxu0 %v628
    %v993 = vpop.f32.mrb[0].mxu0
    %v994 = vadd.f32 %v196, %v993
    %v995 = vpop.f32.mrb[0].mxu0
    %v996 = vpop.f32.mrb[0].mxu0
    %v997 = vadd.f32 %v196, %v996
    %v998 = vpop.f32.mrb[0].mxu0
    %999 = vmatprep.mubr.bf16.mxu0 0
    %1000 = vmatmul.mubr.bf16.gmra.mrb[0].mxu0 %v631
    %v1001 = vpop.f32.mrb[0].mxu0
    %v1002 = vadd.f32 %v196, %v1001
    %v1003 = vpop.f32.mrb[0].mxu0
    %v1004 = vpop.f32.mrb[0].mxu0
    %v1005 = vadd.f32 %v196, %v1004
    %v1006 = vpop.f32.mrb[0].mxu0
    %1007 = vmatprep.mubr.bf16.mxu0 0
    %1008 = vmatmul.mubr.bf16.gmra.mrb[0].mxu0 %v634
    %v1009 = vpop.f32.mrb[0].mxu0
    %v1010 = vadd.f32 %v196, %v1009
    %v1011 = vpop.f32.mrb[0].mxu0
    %v1012 = vpop.f32.mrb[0].mxu0
    %v1013 = vadd.f32 %v196, %v1012
    %v1014 = vpop.f32.mrb[0].mxu0
    %1015 = vmatprep.mubr.bf16.mxu0 0
    %1016 = vmatmul.mubr.bf16.gmra.mrb[0].mxu0 %v637
    %v1017 = vpop.f32.mrb[0].mxu0
    %v1018 = vadd.f32 %v196, %v1017
    %v1019 = vpop.f32.mrb[0].mxu0
    %v1020 = vpop.f32.mrb[0].mxu0
    %v1021 = vadd.f32 %v196, %v1020
    %v1022 = vpop.f32.mrb[0].mxu0
    %1023 = vmatprep.mubr.bf16.mxu0 0
    %1024 = vmatmul.mubr.bf16.gmra.mrb[0].mxu0 %v640
    %v1025 = vpop.f32.mrb[0].mxu0
    %v1026 = vadd.f32 %v196, %v1025
    %v1027 = vpop.f32.mrb[0].mxu0
    %v1028 = vpop.f32.mrb[0].mxu0
    %v1029 = vadd.f32 %v196, %v1028
    %v1030 = vpop.f32.mrb[0].mxu0
    %1031 = vmatprep.mubr.bf16.mxu0 0
    %1032 = vmatmul.mubr.bf16.gmra.mrb[0].mxu0 %v643
    %v1033 = vpop.f32.mrb[0].mxu0
    %v1034 = vadd.f32 %v196, %v1033
    %v1035 = vpop.f32.mrb[0].mxu0
    %v1036 = vpop.f32.mrb[0].mxu0
    %v1037 = vadd.f32 %v196, %v1036
    %v1038 = vpop.f32.mrb[0].mxu0
    %1039 = vmatprep.mubr.bf16.mxu0 0
    %1040 = vmatmul.mubr.bf16.gmra.mrb[0].mxu0 %v646
    %v1041 = vpop.f32.mrb[0].mxu0
    %v1042 = vadd.f32 %v196, %v1041
    %v1043 = vpop.f32.mrb[0].mxu0
    %v1044 = vpop.f32.mrb[0].mxu0
    %v1045 = vadd.f32 %v196, %v1044
    %v1046 = vpop.f32.mrb[0].mxu0
    %1047 = vmatprep.mubr.bf16.mxu0 0
    %1048 = vmatmul.mubr.bf16.gmra.mrb[0].mxu0 %v649
    %v1049 = vpop.f32.mrb[0].mxu0
    %v1050 = vadd.f32 %v196, %v1049
    %v1051 = vpop.f32.mrb[0].mxu0
    %v1052 = vpop.f32.mrb[0].mxu0
    %v1053 = vadd.f32 %v196, %v1052
    %v1054 = vpop.f32.mrb[0].mxu0
    %1055 = vmatprep.mubr.bf16.mxu0 0
    %1056 = vmatmul.mubr.bf16.gmra.mrb[0].mxu0 %v652
    %v1057 = vpop.f32.mrb[0].mxu0
    %v1058 = vadd.f32 %v196, %v1057
    %v1059 = vpop.f32.mrb[0].mxu0
    %v1060 = vpop.f32.mrb[0].mxu0
    %v1061 = vadd.f32 %v196, %v1060
    %v1062 = vpop.f32.mrb[0].mxu0
    %1063 = vmatprep.mubr.bf16.mxu0 0
    %1064 = vmatmul.mubr.bf16.gmra.mrb[0].mxu0 %v655
    %v1065 = vpop.f32.mrb[0].mxu0
    %v1066 = vadd.f32 %v196, %v1065
    %v1067 = vpop.f32.mrb[0].mxu0
    %v1068 = vpop.f32.mrb[0].mxu0
    %v1069 = vadd.f32 %v196, %v1068
    %v1070 = vpop.f32.mrb[0].mxu0
    %1071 = vmatprep.mubr.bf16.mxu0 0
    %1072 = vmatmul.mubr.bf16.gmra.mrb[0].mxu0 %v658
    %v1073 = vpop.f32.mrb[0].mxu0
    %v1074 = vadd.f32 %v196, %v1073
    %v1075 = vpop.f32.mrb[0].mxu0
    %v1076 = vpop.f32.mrb[0].mxu0
    %v1077 = vadd.f32 %v196, %v1076
    %v1078 = vpop.f32.mrb[0].mxu0
    %1079 = vmatprep.mubr.bf16.mxu0 0
    %1080 = vmatmul.mubr.bf16.gmra.mrb[0].mxu0 %v661
    %v1081 = vpop.f32.mrb[0].mxu0
    %v1082 = vadd.f32 %v196, %v1081
    %v1083 = vpop.f32.mrb[0].mxu0
    %v1084 = vpop.f32.mrb[0].mxu0
    %v1085 = vadd.f32 %v196, %v1084
    %v1086 = vpop.f32.mrb[0].mxu0
    %1087 = vmatprep.mubr.bf16.mxu0 0
    %1088 = vmatmul.mubr.bf16.gmra.mrb[0].mxu0 %v664
    %v1089 = vpop.f32.mrb[0].mxu0
    %v1090 = vadd.f32 %v196, %v1089
    %v1091 = vpop.f32.mrb[0].mxu0
    %v1092 = vpop.f32.mrb[0].mxu0
    %v1093 = vadd.f32 %v196, %v1092
    %v1094 = vpop.f32.mrb[0].mxu0
    %1095 = vmatprep.mubr.bf16.mxu0 0
    %1096 = vmatmul.mubr.bf16.gmra.mrb[0].mxu0 %v667
    %v1097 = vpop.f32.mrb[0].mxu0
    %v1098 = vadd.f32 %v196, %v1097
    %v1099 = vpop.f32.mrb[0].mxu0
    %v1100 = vpop.f32.mrb[0].mxu0
    %v1101 = vadd.f32 %v196, %v1100
    %v1102 = vpop.f32.mrb[0].mxu0
    %1103 = vmatprep.mubr.bf16.mxu0 0
    %1104 = vmatmul.mubr.bf16.gmra.mrb[0].mxu0 %v670
    %v1105 = vpop.f32.mrb[0].mxu0
    %v1106 = vadd.f32 %v196, %v1105
    %v1107 = vpop.f32.mrb[0].mxu0
    %v1108 = vpop.f32.mrb[0].mxu0
    %v1109 = vadd.f32 %v196, %v1108
    %v1110 = vpop.f32.mrb[0].mxu0
    %1111 = vmatprep.mubr.bf16.mxu0 0
    %1112 = vmatmul.mubr.bf16.gmra.mrb[0].mxu0 %v673
    %v1113 = vpop.f32.mrb[0].mxu0
    %v1114 = vadd.f32 %v196, %v1113
    %v1115 = vpop.f32.mrb[0].mxu0
    %v1116 = vpop.f32.mrb[0].mxu0
    %v1117 = vadd.f32 %v196, %v1116
    %v1118 = vpop.f32.mrb[0].mxu0
    %1119 = vmatprep.mubr.bf16.mxu0 0
    %1120 = vmatmul.mubr.bf16.gmra.mrb[0].mxu0 %v676
    %v1121 = vpop.f32.mrb[0].mxu0
    %v1122 = vadd.f32 %v196, %v1121
    %v1123 = vpop.f32.mrb[0].mxu0
    %v1124 = vpop.f32.mrb[0].mxu0
    %v1125 = vadd.f32 %v196, %v1124
    %v1126 = vpop.f32.mrb[0].mxu0
    %1127 = vmatprep.mubr.bf16.mxu0 0
    %1128 = vmatmul.mubr.bf16.gmra.mrb[0].mxu0 %v679
    %v1129 = vpop.f32.mrb[0].mxu0
    %v1130 = vadd.f32 %v196, %v1129
    %v1131 = vpop.f32.mrb[0].mxu0
    %v1132 = vpop.f32.mrb[0].mxu0
    %v1133 = vadd.f32 %v196, %v1132
    %v1134 = vpop.f32.mrb[0].mxu0
    %1135 = vmatprep.mubr.bf16.mxu0 0
    %1136 = vmatmul.mubr.bf16.gmra.mrb[0].mxu0 %v682
    %v1137 = vpop.f32.mrb[0].mxu0
    %v1138 = vadd.f32 %v196, %v1137
    %v1139 = vpop.f32.mrb[0].mxu0
    %v1140 = vpop.f32.mrb[0].mxu0
    %v1141 = vadd.f32 %v196, %v1140
    %v1142 = vpop.f32.mrb[0].mxu0
    %1143 = vmatprep.mubr.bf16.mxu0 0
    %1144 = vmatmul.mubr.bf16.gmra.mrb[0].mxu0 %v685
    %v1145 = vpop.f32.mrb[0].mxu0
    %v1146 = vadd.f32 %v196, %v1145
    %v1147 = vpop.f32.mrb[0].mxu0
    %v1148 = vpop.f32.mrb[0].mxu0
    %v1149 = vadd.f32 %v196, %v1148
    %v1150 = vpop.f32.mrb[0].mxu0
    %1151 = vmatprep.mubr.bf16.mxu0 0
    %1152 = vmatmul.mubr.bf16.gmra.mrb[0].mxu0 %v688
    %v1153 = vpop.f32.mrb[0].mxu0
    %v1154 = vadd.f32 %v196, %v1153
    %v1155 = vpop.f32.mrb[0].mxu0
    %v1156 = vpop.f32.mrb[0].mxu0
    %v1157 = vadd.f32 %v196, %v1156
    %v1158 = vpop.f32.mrb[0].mxu0
    %1159 = vmatprep.mubr.bf16.mxu0 0
    %1160 = vmatmul.mubr.bf16.gmra.mrb[0].mxu0 %v691
    %v1161 = vpop.f32.mrb[0].mxu0
    %v1162 = vadd.f32 %v196, %v1161
    %v1163 = vpop.f32.mrb[0].mxu0
    %v1164 = vpop.f32.mrb[0].mxu0
    %v1165 = vadd.f32 %v196, %v1164
    %v1166 = vpop.f32.mrb[0].mxu0
    %1167 = vmatprep.mubr.bf16.mxu0 0
    %1168 = vmatmul.mubr.bf16.gmra.mrb[0].mxu0 %v694
    %v1169 = vpop.f32.mrb[0].mxu0
    %v1170 = vadd.f32 %v196, %v1169
    %v1171 = vpop.f32.mrb[0].mxu0
    %v1172 = vpop.f32.mrb[0].mxu0
    %v1173 = vadd.f32 %v196, %v1172
    %v1174 = vpop.f32.mrb[0].mxu0
    %1175 = vmatprep.mubr.bf16.mxu0 0
    %1176 = vmatmul.mubr.bf16.gmra.mrb[0].mxu0 %v697
    %v1177 = vpop.f32.mrb[0].mxu0
    %v1178 = vadd.f32 %v196, %v1177
    %v1179 = vpop.f32.mrb[0].mxu0
    %v1180 = vpop.f32.mrb[0].mxu0
    %v1181 = vadd.f32 %v196, %v1180
    %v1182 = vpop.f32.mrb[0].mxu0
    %1183 = vmatprep.mubr.bf16.mxu0 0
    %1184 = vmatmul.mubr.bf16.gmra.mrb[0].mxu0 %v700
    %v1185 = vpop.f32.mrb[0].mxu0
    %v1186 = vadd.f32 %v196, %v1185
    %v1187 = vpop.f32.mrb[0].mxu0
    %v1188 = vpop.f32.mrb[0].mxu0
    %v1189 = vadd.f32 %v196, %v1188
    %v1190 = vpop.f32.mrb[0].mxu0
    %1191 = vmatprep.mubr.bf16.mxu0 0
    %1192 = vmatmul.mubr.bf16.gmra.mrb[0].mxu0 %v703
    %v1193 = vpop.f32.mrb[0].mxu0
    %v1194 = vadd.f32 %v196, %v1193
    %v1195 = vpop.f32.mrb[0].mxu0
    %v1196 = vpop.f32.mrb[0].mxu0
    %v1197 = vadd.f32 %v196, %v1196
    %v1198 = vpop.f32.mrb[0].mxu0
    %1199 = vmatprep.mubr.bf16.mxu0 0
    %1200 = vmatmul.mubr.bf16.gmra.mrb[0].mxu0 %v706
    %v1201 = vpop.f32.mrb[0].mxu0
    %v1202 = vadd.f32 %v196, %v1201
    %v1203 = vpop.f32.mrb[0].mxu0
    %v1204 = vpop.f32.mrb[0].mxu0
    %v1205 = vadd.f32 %v196, %v1204
    %v1206 = vpop.f32.mrb[0].mxu0
    %1207 = vmatprep.mubr.bf16.mxu0 0
    %1208 = vmatmul.mubr.bf16.gmra.mrb[0].mxu0 %v709
    %v1209 = vpop.f32.mrb[0].mxu0
    %v1210 = vadd.f32 %v196, %v1209
    %v1211 = vpop.f32.mrb[0].mxu0
    %v1212 = vpop.f32.mrb[0].mxu0
    %v1213 = vadd.f32 %v196, %v1212
    %v1214 = vpop.f32.mrb[0].mxu0
    %1215 = vmatprep.mubr.bf16.mxu0 0
    %1216 = vmatmul.mubr.bf16.gmra.mrb[0].mxu0 %v712
    %v1217 = vpop.f32.mrb[0].mxu0
    %v1218 = vadd.f32 %v196, %v1217
    %v1219 = vpop.f32.mrb[0].mxu0
    %v1220 = vpop.f32.mrb[0].mxu0
    %v1221 = vadd.f32 %v196, %v1220
    %v1222 = vpop.f32.mrb[0].mxu0
    %1223 = vmatprep.mubr.bf16.mxu0 0
    %1224 = vmatmul.mubr.bf16.gmra.mrb[0].mxu0 %v715
    %v1225 = vpop.f32.mrb[0].mxu0
    %v1226 = vadd.f32 %v196, %v1225
    %v1227 = vpop.f32.mrb[0].mxu0
    %v1228 = vpop.f32.mrb[0].mxu0
    %v1229 = vadd.f32 %v196, %v1228
    %v1230 = vpop.f32.mrb[0].mxu0
    %1231 = vmatprep.mubr.bf16.mxu0 0
    %1232 = vmatmul.mubr.bf16.gmra.mrb[0].mxu0 %v718
    %v1233 = vpop.f32.mrb[0].mxu0
    %v1234 = vadd.f32 %v196, %v1233
    %v1235 = vpop.f32.mrb[0].mxu0
    %v1236 = vpop.f32.mrb[0].mxu0
    %v1237 = vadd.f32 %v196, %v1236
    %v1238 = vpop.f32.mrb[0].mxu0
    %1239 = vmatprep.mubr.bf16.mxu0 0
    %1240 = vmatmul.mubr.bf16.gmra.mrb[0].mxu0 %v721
    %v1241 = vpop.f32.mrb[0].mxu0
    %v1242 = vadd.f32 %v196, %v1241
    %v1243 = vpop.f32.mrb[0].mxu0
    %v1244 = vpop.f32.mrb[0].mxu0
    %v1245 = vadd.f32 %v196, %v1244
    %v1246 = vpop.f32.mrb[0].mxu0
    %1247 = vmatprep.mubr.bf16.mxu0 0
    %1248 = vmatmul.mubr.bf16.gmra.mrb[0].mxu0 %v724
    %v1249 = vpop.f32.mrb[0].mxu0
    %v1250 = vadd.f32 %v196, %v1249
    %v1251 = vpop.f32.mrb[0].mxu0
    %v1252 = vpop.f32.mrb[0].mxu0
    %v1253 = vadd.f32 %v196, %v1252
    %v1254 = vpop.f32.mrb[0].mxu0
    %1255 = vmatprep.mubr.bf16.mxu0 0
    %1256 = vmatmul.mubr.bf16.gmra.mrb[0].mxu0 %v727
    %v1257 = vpop.f32.mrb[0].mxu0
    %v1258 = vadd.f32 %v196, %v1257
    %v1259 = vpop.f32.mrb[0].mxu0
    %v1260 = vpop.f32.mrb[0].mxu0
    %v1261 = vadd.f32 %v196, %v1260
    %v1262 = vpop.f32.mrb[0].mxu0
    %1263 = vmatprep.mubr.bf16.mxu0 0
    %1264 = vmatmul.mubr.bf16.gmra.mrb[0].mxu0 %v730
    %v1265 = vpop.f32.mrb[0].mxu0
    %v1266 = vadd.f32 %v196, %v1265
    %v1267 = vpop.f32.mrb[0].mxu0
    %v1268 = vpop.f32.mrb[0].mxu0
    %v1269 = vadd.f32 %v196, %v1268
    %v1270 = vpop.f32.mrb[0].mxu0
    %1271 = vmatprep.mubr.bf16.mxu0 0
    %1272 = vmatmul.mubr.bf16.gmra.mrb[0].mxu0 %v733
    %v1273 = vpop.f32.mrb[0].mxu0
    %v1274 = vadd.f32 %v196, %v1273
    %v1275 = vpop.f32.mrb[0].mxu0
    %v1276 = vpop.f32.mrb[0].mxu0
    %v1277 = vadd.f32 %v196, %v1276
    %v1278 = vpop.f32.mrb[0].mxu0
    %1279 = vdwg.mxu0
    %v1280 = vmax.f32 %v770, 0.0
    %v1281 = vmax.f32 %v773, 0.0
    %v1282 = vmax.f32 %v778, 0.0
    %v1283 = vmax.f32 %v781, 0.0
    %v1284 = vmax.f32 %v786, 0.0
    %v1285 = vmax.f32 %v789, 0.0
    %v1286 = vmax.f32 %v794, 0.0
    %v1287 = vmax.f32 %v797, 0.0
    %v1288 = vmax.f32 %v802, 0.0
    %v1289 = vmax.f32 %v805, 0.0
    %v1290 = vmax.f32 %v810, 0.0
    %v1291 = vmax.f32 %v813, 0.0
    %v1292 = vmax.f32 %v818, 0.0
    %v1293 = vmax.f32 %v821, 0.0
    %v1294 = vmax.f32 %v826, 0.0
    %v1295 = vmax.f32 %v829, 0.0
    %v1296 = vmax.f32 %v834, 0.0
    %v1297 = vmax.f32 %v837, 0.0
    %v1298 = vmax.f32 %v842, 0.0
    %v1299 = vmax.f32 %v845, 0.0
    %v1300 = vmax.f32 %v850, 0.0
    %v1301 = vmax.f32 %v853, 0.0
    %v1302 = vmax.f32 %v858, 0.0
    %v1303 = vmax.f32 %v861, 0.0
    %v1304 = vmax.f32 %v866, 0.0
    %v1305 = vmax.f32 %v869, 0.0
    %v1306 = vmax.f32 %v874, 0.0
    %v1307 = vmax.f32 %v877, 0.0
    %v1308 = vmax.f32 %v882, 0.0
    %v1309 = vmax.f32 %v885, 0.0
    %v1310 = vmax.f32 %v890, 0.0
    %v1311 = vmax.f32 %v893, 0.0
    %v1312 = vmax.f32 %v898, 0.0
    %v1313 = vmax.f32 %v901, 0.0
    %v1314 = vmax.f32 %v906, 0.0
    %v1315 = vmax.f32 %v909, 0.0
    %v1316 = vmax.f32 %v914, 0.0
    %v1317 = vmax.f32 %v917, 0.0
    %v1318 = vmax.f32 %v922, 0.0
    %v1319 = vmax.f32 %v925, 0.0
    %v1320 = vmax.f32 %v930, 0.0
    %v1321 = vmax.f32 %v933, 0.0
    %v1322 = vmax.f32 %v938, 0.0
    %v1323 = vmax.f32 %v941, 0.0
    %v1324 = vmax.f32 %v946, 0.0
    %v1325 = vmax.f32 %v949, 0.0
    %v1326 = vmax.f32 %v954, 0.0
    %v1327 = vmax.f32 %v957, 0.0
    %v1328 = vmax.f32 %v962, 0.0
    %v1329 = vmax.f32 %v965, 0.0
    %v1330 = vmax.f32 %v970, 0.0
    %v1331 = vmax.f32 %v973, 0.0
    %v1332 = vmax.f32 %v978, 0.0
    %v1333 = vmax.f32 %v981, 0.0
    %v1334 = vmax.f32 %v986, 0.0
    %v1335 = vmax.f32 %v989, 0.0
    %v1336 = vmax.f32 %v994, 0.0
    %v1337 = vmax.f32 %v997, 0.0
    %v1338 = vmax.f32 %v1002, 0.0
    %v1339 = vmax.f32 %v1005, 0.0
    %v1340 = vmax.f32 %v1010, 0.0
    %v1341 = vmax.f32 %v1013, 0.0
    %v1342 = vmax.f32 %v1018, 0.0
    %v1343 = vmax.f32 %v1021, 0.0
    %v1344 = vmax.f32 %v1026, 0.0
    %v1345 = vmax.f32 %v1029, 0.0
    %v1346 = vmax.f32 %v1034, 0.0
    %v1347 = vmax.f32 %v1037, 0.0
    %v1348 = vmax.f32 %v1042, 0.0
    %v1349 = vmax.f32 %v1045, 0.0
    %v1350 = vmax.f32 %v1050, 0.0
    %v1351 = vmax.f32 %v1053, 0.0
    %v1352 = vmax.f32 %v1058, 0.0
    %v1353 = vmax.f32 %v1061, 0.0
    %v1354 = vmax.f32 %v1066, 0.0
    %v1355 = vmax.f32 %v1069, 0.0
    %v1356 = vmax.f32 %v1074, 0.0
    %v1357 = vmax.f32 %v1077, 0.0
    %v1358 = vmax.f32 %v1082, 0.0
    %v1359 = vmax.f32 %v1085, 0.0
    %v1360 = vmax.f32 %v1090, 0.0
    %v1361 = vmax.f32 %v1093, 0.0
    %v1362 = vmax.f32 %v1098, 0.0
    %v1363 = vmax.f32 %v1101, 0.0
    %v1364 = vmax.f32 %v1106, 0.0
    %v1365 = vmax.f32 %v1109, 0.0
    %v1366 = vmax.f32 %v1114, 0.0
    %v1367 = vmax.f32 %v1117, 0.0
    %v1368 = vmax.f32 %v1122, 0.0
    %v1369 = vmax.f32 %v1125, 0.0
    %v1370 = vmax.f32 %v1130, 0.0
    %v1371 = vmax.f32 %v1133, 0.0
    %v1372 = vmax.f32 %v1138, 0.0
    %v1373 = vmax.f32 %v1141, 0.0
    %v1374 = vmax.f32 %v1146, 0.0
    %v1375 = vmax.f32 %v1149, 0.0
    %v1376 = vmax.f32 %v1154, 0.0
    %v1377 = vmax.f32 %v1157, 0.0
    %v1378 = vmax.f32 %v1162, 0.0
    %v1379 = vmax.f32 %v1165, 0.0
    %v1380 = vmax.f32 %v1170, 0.0
    %v1381 = vmax.f32 %v1173, 0.0
    %v1382 = vmax.f32 %v1178, 0.0
    %v1383 = vmax.f32 %v1181, 0.0
    %v1384 = vmax.f32 %v1186, 0.0
    %v1385 = vmax.f32 %v1189, 0.0
    %v1386 = vmax.f32 %v1194, 0.0
    %v1387 = vmax.f32 %v1197, 0.0
    %v1388 = vmax.f32 %v1202, 0.0
    %v1389 = vmax.f32 %v1205, 0.0
    %v1390 = vmax.f32 %v1210, 0.0
    %v1391 = vmax.f32 %v1213, 0.0
    %v1392 = vmax.f32 %v1218, 0.0
    %v1393 = vmax.f32 %v1221, 0.0
    %v1394 = vmax.f32 %v1226, 0.0
    %v1395 = vmax.f32 %v1229, 0.0
    %v1396 = vmax.f32 %v1234, 0.0
    %v1397 = vmax.f32 %v1237, 0.0
    %v1398 = vmax.f32 %v1242, 0.0
    %v1399 = vmax.f32 %v1245, 0.0
    %v1400 = vmax.f32 %v1250, 0.0
    %v1401 = vmax.f32 %v1253, 0.0
    %v1402 = vmax.f32 %v1258, 0.0
    %v1403 = vmax.f32 %v1261, 0.0
    %v1404 = vmax.f32 %v1266, 0.0
    %v1405 = vmax.f32 %v1269, 0.0
    %v1406 = vmax.f32 %v1274, 0.0
    %v1407 = vmax.f32 %v1277, 0.0
    %v1408 = vpack.c.bf16 %v1281, %v1280
    %v1409 = vpack.c.bf16 %v1283, %v1282
    %v1410 = vpack.c.bf16 %v1285, %v1284
    %v1411 = vpack.c.bf16 %v1287, %v1286
    %v1412 = vpack.c.bf16 %v1289, %v1288
    %v1413 = vpack.c.bf16 %v1291, %v1290
    %v1414 = vpack.c.bf16 %v1293, %v1292
    %v1415 = vpack.c.bf16 %v1295, %v1294
    %v1416 = vpack.c.bf16 %v1297, %v1296
    %v1417 = vpack.c.bf16 %v1299, %v1298
    %v1418 = vpack.c.bf16 %v1301, %v1300
    %v1419 = vpack.c.bf16 %v1303, %v1302
    %v1420 = vpack.c.bf16 %v1305, %v1304
    %v1421 = vpack.c.bf16 %v1307, %v1306
    %v1422 = vpack.c.bf16 %v1309, %v1308
    %v1423 = vpack.c.bf16 %v1311, %v1310
    %v1424 = vpack.c.bf16 %v1313, %v1312
    %v1425 = vpack.c.bf16 %v1315, %v1314
    %v1426 = vpack.c.bf16 %v1317, %v1316
    %v1427 = vpack.c.bf16 %v1319, %v1318
    %v1428 = vpack.c.bf16 %v1321, %v1320
    %v1429 = vpack.c.bf16 %v1323, %v1322
    %v1430 = vpack.c.bf16 %v1325, %v1324
    %v1431 = vpack.c.bf16 %v1327, %v1326
    %v1432 = vpack.c.bf16 %v1329, %v1328
    %v1433 = vpack.c.bf16 %v1331, %v1330
    %v1434 = vpack.c.bf16 %v1333, %v1332
    %v1435 = vpack.c.bf16 %v1335, %v1334
    %v1436 = vpack.c.bf16 %v1337, %v1336
    %v1437 = vpack.c.bf16 %v1339, %v1338
    %v1438 = vpack.c.bf16 %v1341, %v1340
    %v1439 = vpack.c.bf16 %v1343, %v1342
    %v1440 = vpack.c.bf16 %v1345, %v1344
    %v1441 = vpack.c.bf16 %v1347, %v1346
    %v1442 = vpack.c.bf16 %v1349, %v1348
    %v1443 = vpack.c.bf16 %v1351, %v1350
    %v1444 = vpack.c.bf16 %v1353, %v1352
    %v1445 = vpack.c.bf16 %v1355, %v1354
    %v1446 = vpack.c.bf16 %v1357, %v1356
    %v1447 = vpack.c.bf16 %v1359, %v1358
    %v1448 = vpack.c.bf16 %v1361, %v1360
    %v1449 = vpack.c.bf16 %v1363, %v1362
    %v1450 = vpack.c.bf16 %v1365, %v1364
    %v1451 = vpack.c.bf16 %v1367, %v1366
    %v1452 = vpack.c.bf16 %v1369, %v1368
    %v1453 = vpack.c.bf16 %v1371, %v1370
    %v1454 = vpack.c.bf16 %v1373, %v1372
    %v1455 = vpack.c.bf16 %v1375, %v1374
    %v1456 = vpack.c.bf16 %v1377, %v1376
    %v1457 = vpack.c.bf16 %v1379, %v1378
    %v1458 = vpack.c.bf16 %v1381, %v1380
    %v1459 = vpack.c.bf16 %v1383, %v1382
    %v1460 = vpack.c.bf16 %v1385, %v1384
    %v1461 = vpack.c.bf16 %v1387, %v1386
    %v1462 = vpack.c.bf16 %v1389, %v1388
    %v1463 = vpack.c.bf16 %v1391, %v1390
    %v1464 = vpack.c.bf16 %v1393, %v1392
    %v1465 = vpack.c.bf16 %v1395, %v1394
    %v1466 = vpack.c.bf16 %v1397, %v1396
    %v1467 = vpack.c.bf16 %v1399, %v1398
    %v1468 = vpack.c.bf16 %v1401, %v1400
    %v1469 = vpack.c.bf16 %v1403, %v1402
    %v1470 = vpack.c.bf16 %v1405, %v1404
    %v1471 = vpack.c.bf16 %v1407, %v1406
    %v1536 = vunpack.c.l.b16 %v1408
    %v1537 = vunpack.c.h.b16 %v1408
    %v1538 = vunpack.c.l.b16 %v1409
    %v1539 = vunpack.c.h.b16 %v1409
    %v1540 = vunpack.c.l.b16 %v1410
    %v1541 = vunpack.c.h.b16 %v1410
    %v1542 = vunpack.c.l.b16 %v1411
    %v1543 = vunpack.c.h.b16 %v1411
    %v1544 = vunpack.c.l.b16 %v1412
    %v1545 = vunpack.c.h.b16 %v1412
    %v1546 = vunpack.c.l.b16 %v1413
    %v1547 = vunpack.c.h.b16 %v1413
    %v1548 = vunpack.c.l.b16 %v1414
    %v1549 = vunpack.c.h.b16 %v1414
    %v1550 = vunpack.c.l.b16 %v1415
    %v1551 = vunpack.c.h.b16 %v1415
    %v1552 = vunpack.c.l.b16 %v1416
    %v1553 = vunpack.c.h.b16 %v1416
    %v1554 = vunpack.c.l.b16 %v1417
    %v1555 = vunpack.c.h.b16 %v1417
    %v1556 = vunpack.c.l.b16 %v1418
    %v1557 = vunpack.c.h.b16 %v1418
    %v1558 = vunpack.c.l.b16 %v1419
    %v1559 = vunpack.c.h.b16 %v1419
    %v1560 = vunpack.c.l.b16 %v1420
    %v1561 = vunpack.c.h.b16 %v1420
    %v1562 = vunpack.c.l.b16 %v1421
    %v1563 = vunpack.c.h.b16 %v1421
    %v1564 = vunpack.c.l.b16 %v1422
    %v1565 = vunpack.c.h.b16 %v1422
    %v1566 = vunpack.c.l.b16 %v1423
    %v1567 = vunpack.c.h.b16 %v1423
    %v1568 = vunpack.c.l.b16 %v1424
    %v1569 = vunpack.c.h.b16 %v1424
    %v1570 = vunpack.c.l.b16 %v1425
    %v1571 = vunpack.c.h.b16 %v1425
    %v1572 = vunpack.c.l.b16 %v1426
    %v1573 = vunpack.c.h.b16 %v1426
    %v1574 = vunpack.c.l.b16 %v1427
    %v1575 = vunpack.c.h.b16 %v1427
    %v1576 = vunpack.c.l.b16 %v1428
    %v1577 = vunpack.c.h.b16 %v1428
    %v1578 = vunpack.c.l.b16 %v1429
    %v1579 = vunpack.c.h.b16 %v1429
    %v1580 = vunpack.c.l.b16 %v1430
    %v1581 = vunpack.c.h.b16 %v1430
    %v1582 = vunpack.c.l.b16 %v1431
    %v1583 = vunpack.c.h.b16 %v1431
    %v1584 = vunpack.c.l.b16 %v1432
    %v1585 = vunpack.c.h.b16 %v1432
    %v1586 = vunpack.c.l.b16 %v1433
    %v1587 = vunpack.c.h.b16 %v1433
    %v1588 = vunpack.c.l.b16 %v1434
    %v1589 = vunpack.c.h.b16 %v1434
    %v1590 = vunpack.c.l.b16 %v1435
    %v1591 = vunpack.c.h.b16 %v1435
    %v1592 = vunpack.c.l.b16 %v1436
    %v1593 = vunpack.c.h.b16 %v1436
    %v1594 = vunpack.c.l.b16 %v1437
    %v1595 = vunpack.c.h.b16 %v1437
    %v1596 = vunpack.c.l.b16 %v1438
    %v1597 = vunpack.c.h.b16 %v1438
    %v1598 = vunpack.c.l.b16 %v1439
    %v1599 = vunpack.c.h.b16 %v1439
    %v1600 = vunpack.c.l.b16 %v1440
    %v1601 = vunpack.c.h.b16 %v1440
    %v1602 = vunpack.c.l.b16 %v1441
    %v1603 = vunpack.c.h.b16 %v1441
    %v1604 = vunpack.c.l.b16 %v1442
    %v1605 = vunpack.c.h.b16 %v1442
    %v1606 = vunpack.c.l.b16 %v1443
    %v1607 = vunpack.c.h.b16 %v1443
    %v1608 = vunpack.c.l.b16 %v1444
    %v1609 = vunpack.c.h.b16 %v1444
    %v1610 = vunpack.c.l.b16 %v1445
    %v1611 = vunpack.c.h.b16 %v1445
    %v1612 = vunpack.c.l.b16 %v1446
    %v1613 = vunpack.c.h.b16 %v1446
    %v1614 = vunpack.c.l.b16 %v1447
    %v1615 = vunpack.c.h.b16 %v1447
    %v1616 = vunpack.c.l.b16 %v1448
    %v1617 = vunpack.c.h.b16 %v1448
    %v1618 = vunpack.c.l.b16 %v1449
    %v1619 = vunpack.c.h.b16 %v1449
    %v1620 = vunpack.c.l.b16 %v1450
    %v1621 = vunpack.c.h.b16 %v1450
    %v1622 = vunpack.c.l.b16 %v1451
    %v1623 = vunpack.c.h.b16 %v1451
    %v1624 = vunpack.c.l.b16 %v1452
    %v1625 = vunpack.c.h.b16 %v1452
    %v1626 = vunpack.c.l.b16 %v1453
    %v1627 = vunpack.c.h.b16 %v1453
    %v1628 = vunpack.c.l.b16 %v1454
    %v1629 = vunpack.c.h.b16 %v1454
    %v1630 = vunpack.c.l.b16 %v1455
    %v1631 = vunpack.c.h.b16 %v1455
    %v1632 = vunpack.c.l.b16 %v1456
    %v1633 = vunpack.c.h.b16 %v1456
    %v1634 = vunpack.c.l.b16 %v1457
    %v1635 = vunpack.c.h.b16 %v1457
    %v1636 = vunpack.c.l.b16 %v1458
    %v1637 = vunpack.c.h.b16 %v1458
    %v1638 = vunpack.c.l.b16 %v1459
    %v1639 = vunpack.c.h.b16 %v1459
    %v1640 = vunpack.c.l.b16 %v1460
    %v1641 = vunpack.c.h.b16 %v1460
    %v1642 = vunpack.c.l.b16 %v1461
    %v1643 = vunpack.c.h.b16 %v1461
    %v1644 = vunpack.c.l.b16 %v1462
    %v1645 = vunpack.c.h.b16 %v1462
    %v1646 = vunpack.c.l.b16 %v1463
    %v1647 = vunpack.c.h.b16 %v1463
    %v1648 = vunpack.c.l.b16 %v1464
    %v1649 = vunpack.c.h.b16 %v1464
    %v1650 = vunpack.c.l.b16 %v1465
    %v1651 = vunpack.c.h.b16 %v1465
    %v1652 = vunpack.c.l.b16 %v1466
    %v1653 = vunpack.c.h.b16 %v1466
    %v1654 = vunpack.c.l.b16 %v1467
    %v1655 = vunpack.c.h.b16 %v1467
    %v1656 = vunpack.c.l.b16 %v1468
    %v1657 = vunpack.c.h.b16 %v1468
    %v1658 = vunpack.c.l.b16 %v1469
    %v1659 = vunpack.c.h.b16 %v1469
    %v1660 = vunpack.c.l.b16 %v1470
    %v1661 = vunpack.c.h.b16 %v1470
    %v1662 = vunpack.c.l.b16 %v1471
    %v1663 = vunpack.c.h.b16 %v1471
    %v1664 = vpack.c.b16 %v1536, %v1536
    %v1665 = vpack.c.b16 %v1537, %v1537
    %v1666 = vpack.c.b16 %v1538, %v1538
    %v1667 = vpack.c.b16 %v1539, %v1539
    %v1668 = vpack.c.b16 %v1540, %v1540
    %v1669 = vpack.c.b16 %v1541, %v1541
    %v1670 = vpack.c.b16 %v1542, %v1542
    %v1671 = vpack.c.b16 %v1543, %v1543
    %v1672 = vpack.c.b16 %v1544, %v1544
    %v1673 = vpack.c.b16 %v1545, %v1545
    %v1674 = vpack.c.b16 %v1546, %v1546
    %v1675 = vpack.c.b16 %v1547, %v1547
    %v1676 = vpack.c.b16 %v1548, %v1548
    %v1677 = vpack.c.b16 %v1549, %v1549
    %v1678 = vpack.c.b16 %v1550, %v1550
    %v1679 = vpack.c.b16 %v1551, %v1551
    %v1680 = vpack.c.b16 %v1552, %v1552
    %v1681 = vpack.c.b16 %v1553, %v1553
    %v1682 = vpack.c.b16 %v1554, %v1554
    %v1683 = vpack.c.b16 %v1555, %v1555
    %v1684 = vpack.c.b16 %v1556, %v1556
    %v1685 = vpack.c.b16 %v1557, %v1557
    %v1686 = vpack.c.b16 %v1558, %v1558
    %v1687 = vpack.c.b16 %v1559, %v1559
    %v1688 = vpack.c.b16 %v1560, %v1560
    %v1689 = vpack.c.b16 %v1561, %v1561
    %v1690 = vpack.c.b16 %v1562, %v1562
    %v1691 = vpack.c.b16 %v1563, %v1563
    %v1692 = vpack.c.b16 %v1564, %v1564
    %v1693 = vpack.c.b16 %v1565, %v1565
    %v1694 = vpack.c.b16 %v1566, %v1566
    %v1695 = vpack.c.b16 %v1567, %v1567
    %v1696 = vpack.c.b16 %v1568, %v1568
    %v1697 = vpack.c.b16 %v1569, %v1569
    %v1698 = vpack.c.b16 %v1570, %v1570
    %v1699 = vpack.c.b16 %v1571, %v1571
    %v1700 = vpack.c.b16 %v1572, %v1572
    %v1701 = vpack.c.b16 %v1573, %v1573
    %v1702 = vpack.c.b16 %v1574, %v1574
    %v1703 = vpack.c.b16 %v1575, %v1575
    %v1704 = vpack.c.b16 %v1576, %v1576
    %v1705 = vpack.c.b16 %v1577, %v1577
    %v1706 = vpack.c.b16 %v1578, %v1578
    %v1707 = vpack.c.b16 %v1579, %v1579
    %v1708 = vpack.c.b16 %v1580, %v1580
    %v1709 = vpack.c.b16 %v1581, %v1581
    %v1710 = vpack.c.b16 %v1582, %v1582
    %v1711 = vpack.c.b16 %v1583, %v1583
    %v1712 = vpack.c.b16 %v1584, %v1584
    %v1713 = vpack.c.b16 %v1585, %v1585
    %v1714 = vpack.c.b16 %v1586, %v1586
    %v1715 = vpack.c.b16 %v1587, %v1587
    %v1716 = vpack.c.b16 %v1588, %v1588
    %v1717 = vpack.c.b16 %v1589, %v1589
    %v1718 = vpack.c.b16 %v1590, %v1590
    %v1719 = vpack.c.b16 %v1591, %v1591
    %v1720 = vpack.c.b16 %v1592, %v1592
    %v1721 = vpack.c.b16 %v1593, %v1593
    %v1722 = vpack.c.b16 %v1594, %v1594
    %v1723 = vpack.c.b16 %v1595, %v1595
    %v1724 = vpack.c.b16 %v1596, %v1596
    %v1725 = vpack.c.b16 %v1597, %v1597
    %v1726 = vpack.c.b16 %v1598, %v1598
    %v1727 = vpack.c.b16 %v1599, %v1599
    %v1728 = vpack.c.b16 %v1600, %v1600
    %v1729 = vpack.c.b16 %v1601, %v1601
    %v1730 = vpack.c.b16 %v1602, %v1602
    %v1731 = vpack.c.b16 %v1603, %v1603
    %v1732 = vpack.c.b16 %v1604, %v1604
    %v1733 = vpack.c.b16 %v1605, %v1605
    %v1734 = vpack.c.b16 %v1606, %v1606
    %v1735 = vpack.c.b16 %v1607, %v1607
    %v1736 = vpack.c.b16 %v1608, %v1608
    %v1737 = vpack.c.b16 %v1609, %v1609
    %v1738 = vpack.c.b16 %v1610, %v1610
    %v1739 = vpack.c.b16 %v1611, %v1611
    %v1740 = vpack.c.b16 %v1612, %v1612
    %v1741 = vpack.c.b16 %v1613, %v1613
    %v1742 = vpack.c.b16 %v1614, %v1614
    %v1743 = vpack.c.b16 %v1615, %v1615
    %v1744 = vpack.c.b16 %v1616, %v1616
    %v1745 = vpack.c.b16 %v1617, %v1617
    %v1746 = vpack.c.b16 %v1618, %v1618
    %v1747 = vpack.c.b16 %v1619, %v1619
    %v1748 = vpack.c.b16 %v1620, %v1620
    %v1749 = vpack.c.b16 %v1621, %v1621
    %v1750 = vpack.c.b16 %v1622, %v1622
    %v1751 = vpack.c.b16 %v1623, %v1623
    %v1752 = vpack.c.b16 %v1624, %v1624
    %v1753 = vpack.c.b16 %v1625, %v1625
    %v1754 = vpack.c.b16 %v1626, %v1626
    %v1755 = vpack.c.b16 %v1627, %v1627
    %v1756 = vpack.c.b16 %v1628, %v1628
    %v1757 = vpack.c.b16 %v1629, %v1629
    %v1758 = vpack.c.b16 %v1630, %v1630
    %v1759 = vpack.c.b16 %v1631, %v1631
    %v1760 = vpack.c.b16 %v1632, %v1632
    %v1761 = vpack.c.b16 %v1633, %v1633
    %v1762 = vpack.c.b16 %v1634, %v1634
    %v1763 = vpack.c.b16 %v1635, %v1635
    %v1764 = vpack.c.b16 %v1636, %v1636
    %v1765 = vpack.c.b16 %v1637, %v1637
    %v1766 = vpack.c.b16 %v1638, %v1638
    %v1767 = vpack.c.b16 %v1639, %v1639
    %v1768 = vpack.c.b16 %v1640, %v1640
    %v1769 = vpack.c.b16 %v1641, %v1641
    %v1770 = vpack.c.b16 %v1642, %v1642
    %v1771 = vpack.c.b16 %v1643, %v1643
    %v1772 = vpack.c.b16 %v1644, %v1644
    %v1773 = vpack.c.b16 %v1645, %v1645
    %v1774 = vpack.c.b16 %v1646, %v1646
    %v1775 = vpack.c.b16 %v1647, %v1647
    %v1776 = vpack.c.b16 %v1648, %v1648
    %v1777 = vpack.c.b16 %v1649, %v1649
    %v1778 = vpack.c.b16 %v1650, %v1650
    %v1779 = vpack.c.b16 %v1651, %v1651
    %v1780 = vpack.c.b16 %v1652, %v1652
    %v1781 = vpack.c.b16 %v1653, %v1653
    %v1782 = vpack.c.b16 %v1654, %v1654
    %v1783 = vpack.c.b16 %v1655, %v1655
    %v1784 = vpack.c.b16 %v1656, %v1656
    %v1785 = vpack.c.b16 %v1657, %v1657
    %v1786 = vpack.c.b16 %v1658, %v1658
    %v1787 = vpack.c.b16 %v1659, %v1659
    %v1788 = vpack.c.b16 %v1660, %v1660
    %v1789 = vpack.c.b16 %v1661, %v1661
    %v1790 = vpack.c.b16 %v1662, %v1662
    %v1791 = vpack.c.b16 %v1663, %v1663
    %1920 = vst [vmem:[#allocation8] sm:$0xf] %v1664
    %1921 = vst [vmem:[#allocation8 + $0x4] sm:$0xf] %v1665
    %1922 = vst [vmem:[#allocation8 + $0x8] sm:$0xf] %v1666
    %1923 = vst [vmem:[#allocation8 + $0xc] sm:$0xf] %v1667
    %1924 = vst [vmem:[#allocation8 + $0x10] sm:$0xf] %v1668
    %1925 = vst [vmem:[#allocation8 + $0x14] sm:$0xf] %v1669
    %1926 = vst [vmem:[#allocation8 + $0x18] sm:$0xf] %v1670
    %1927 = vst [vmem:[#allocation8 + $0x1c] sm:$0xf] %v1671
    %1928 = vst [vmem:[#allocation8 + $0x20] sm:$0xf] %v1672
    %1929 = vst [vmem:[#allocation8 + $0x24] sm:$0xf] %v1673
    %1930 = vst [vmem:[#allocation8 + $0x28] sm:$0xf] %v1674
    %1931 = vst [vmem:[#allocation8 + $0x2c] sm:$0xf] %v1675
    %1932 = vst [vmem:[#allocation8 + $0x30] sm:$0xf] %v1676
    %1933 = vst [vmem:[#allocation8 + $0x34] sm:$0xf] %v1677
    %1934 = vst [vmem:[#allocation8 + $0x38] sm:$0xf] %v1678
    %1935 = vst [vmem:[#allocation8 + $0x3c] sm:$0xf] %v1679
    %1936 = vst [vmem:[#allocation8 + $0x40] sm:$0xf] %v1680
    %1937 = vst [vmem:[#allocation8 + $0x44] sm:$0xf] %v1681
    %1938 = vst [vmem:[#allocation8 + $0x48] sm:$0xf] %v1682
    %1939 = vst [vmem:[#allocation8 + $0x4c] sm:$0xf] %v1683
    %1940 = vst [vmem:[#allocation8 + $0x50] sm:$0xf] %v1684
    %1941 = vst [vmem:[#allocation8 + $0x54] sm:$0xf] %v1685
    %1942 = vst [vmem:[#allocation8 + $0x58] sm:$0xf] %v1686
    %1943 = vst [vmem:[#allocation8 + $0x5c] sm:$0xf] %v1687
    %1944 = vst [vmem:[#allocation8 + $0x60] sm:$0xf] %v1688
    %1945 = vst [vmem:[#allocation8 + $0x64] sm:$0xf] %v1689
    %1946 = vst [vmem:[#allocation8 + $0x68] sm:$0xf] %v1690
    %1947 = vst [vmem:[#allocation8 + $0x6c] sm:$0xf] %v1691
    %1948 = vst [vmem:[#allocation8 + $0x70] sm:$0xf] %v1692
    %1949 = vst [vmem:[#allocation8 + $0x74] sm:$0xf] %v1693
    %1950 = vst [vmem:[#allocation8 + $0x78] sm:$0xf] %v1694
    %1951 = vst [vmem:[#allocation8 + $0x7c] sm:$0xf] %v1695
    %1952 = vst [vmem:[#allocation8 + $0x80] sm:$0xf] %v1696
    %1953 = vst [vmem:[#allocation8 + $0x84] sm:$0xf] %v1697
    %1954 = vst [vmem:[#allocation8 + $0x88] sm:$0xf] %v1698
    %1955 = vst [vmem:[#allocation8 + $0x8c] sm:$0xf] %v1699
    %1956 = vst [vmem:[#allocation8 + $0x90] sm:$0xf] %v1700
    %1957 = vst [vmem:[#allocation8 + $0x94] sm:$0xf] %v1701
    %1958 = vst [vmem:[#allocation8 + $0x98] sm:$0xf] %v1702
    %1959 = vst [vmem:[#allocation8 + $0x9c] sm:$0xf] %v1703
    %1960 = vst [vmem:[#allocation8 + $0xa0] sm:$0xf] %v1704
    %1961 = vst [vmem:[#allocation8 + $0xa4] sm:$0xf] %v1705
    %1962 = vst [vmem:[#allocation8 + $0xa8] sm:$0xf] %v1706
    %1963 = vst [vmem:[#allocation8 + $0xac] sm:$0xf] %v1707
    %1964 = vst [vmem:[#allocation8 + $0xb0] sm:$0xf] %v1708
    %1965 = vst [vmem:[#allocation8 + $0xb4] sm:$0xf] %v1709
    %1966 = vst [vmem:[#allocation8 + $0xb8] sm:$0xf] %v1710
    %1967 = vst [vmem:[#allocation8 + $0xbc] sm:$0xf] %v1711
    %1968 = vst [vmem:[#allocation8 + $0xc0] sm:$0xf] %v1712
    %1969 = vst [vmem:[#allocation8 + $0xc4] sm:$0xf] %v1713
    %1970 = vst [vmem:[#allocation8 + $0xc8] sm:$0xf] %v1714
    %1971 = vst [vmem:[#allocation8 + $0xcc] sm:$0xf] %v1715
    %1972 = vst [vmem:[#allocation8 + $0xd0] sm:$0xf] %v1716
    %1973 = vst [vmem:[#allocation8 + $0xd4] sm:$0xf] %v1717
    %1974 = vst [vmem:[#allocation8 + $0xd8] sm:$0xf] %v1718
    %1975 = vst [vmem:[#allocation8 + $0xdc] sm:$0xf] %v1719
    %1976 = vst [vmem:[#allocation8 + $0xe0] sm:$0xf] %v1720
    %1977 = vst [vmem:[#allocation8 + $0xe4] sm:$0xf] %v1721
    %1978 = vst [vmem:[#allocation8 + $0xe8] sm:$0xf] %v1722
    %1979 = vst [vmem:[#allocation8 + $0xec] sm:$0xf] %v1723
    %1980 = vst [vmem:[#allocation8 + $0xf0] sm:$0xf] %v1724
    %1981 = vst [vmem:[#allocation8 + $0xf4] sm:$0xf] %v1725
    %1982 = vst [vmem:[#allocation8 + $0xf8] sm:$0xf] %v1726
    %1983 = vst [vmem:[#allocation8 + $0xfc] sm:$0xf] %v1727
    %1984 = vst [vmem:[#allocation8 + $0x100] sm:$0xf] %v1728
    %1985 = vst [vmem:[#allocation8 + $0x104] sm:$0xf] %v1729
    %1986 = vst [vmem:[#allocation8 + $0x108] sm:$0xf] %v1730
    %1987 = vst [vmem:[#allocation8 + $0x10c] sm:$0xf] %v1731
    %1988 = vst [vmem:[#allocation8 + $0x110] sm:$0xf] %v1732
    %1989 = vst [vmem:[#allocation8 + $0x114] sm:$0xf] %v1733
    %1990 = vst [vmem:[#allocation8 + $0x118] sm:$0xf] %v1734
    %1991 = vst [vmem:[#allocation8 + $0x11c] sm:$0xf] %v1735
    %1992 = vst [vmem:[#allocation8 + $0x120] sm:$0xf] %v1736
    %1993 = vst [vmem:[#allocation8 + $0x124] sm:$0xf] %v1737
    %1994 = vst [vmem:[#allocation8 + $0x128] sm:$0xf] %v1738
    %1995 = vst [vmem:[#allocation8 + $0x12c] sm:$0xf] %v1739
    %1996 = vst [vmem:[#allocation8 + $0x130] sm:$0xf] %v1740
    %1997 = vst [vmem:[#allocation8 + $0x134] sm:$0xf] %v1741
    %1998 = vst [vmem:[#allocation8 + $0x138] sm:$0xf] %v1742
    %1999 = vst [vmem:[#allocation8 + $0x13c] sm:$0xf] %v1743
    %2000 = vst [vmem:[#allocation8 + $0x140] sm:$0xf] %v1744
    %2001 = vst [vmem:[#allocation8 + $0x144] sm:$0xf] %v1745
    %2002 = vst [vmem:[#allocation8 + $0x148] sm:$0xf] %v1746
    %2003 = vst [vmem:[#allocation8 + $0x14c] sm:$0xf] %v1747
    %2004 = vst [vmem:[#allocation8 + $0x150] sm:$0xf] %v1748
    %2005 = vst [vmem:[#allocation8 + $0x154] sm:$0xf] %v1749
    %2006 = vst [vmem:[#allocation8 + $0x158] sm:$0xf] %v1750
    %2007 = vst [vmem:[#allocation8 + $0x15c] sm:$0xf] %v1751
    %2008 = vst [vmem:[#allocation8 + $0x160] sm:$0xf] %v1752
    %2009 = vst [vmem:[#allocation8 + $0x164] sm:$0xf] %v1753
    %2010 = vst [vmem:[#allocation8 + $0x168] sm:$0xf] %v1754
    %2011 = vst [vmem:[#allocation8 + $0x16c] sm:$0xf] %v1755
    %2012 = vst [vmem:[#allocation8 + $0x170] sm:$0xf] %v1756
    %2013 = vst [vmem:[#allocation8 + $0x174] sm:$0xf] %v1757
    %2014 = vst [vmem:[#allocation8 + $0x178] sm:$0xf] %v1758
    %2015 = vst [vmem:[#allocation8 + $0x17c] sm:$0xf] %v1759
    %2016 = vst [vmem:[#allocation8 + $0x180] sm:$0xf] %v1760
    %2017 = vst [vmem:[#allocation8 + $0x184] sm:$0xf] %v1761
    %2018 = vst [vmem:[#allocation8 + $0x188] sm:$0xf] %v1762
    %2019 = vst [vmem:[#allocation8 + $0x18c] sm:$0xf] %v1763
    %2020 = vst [vmem:[#allocation8 + $0x190] sm:$0xf] %v1764
    %2021 = vst [vmem:[#allocation8 + $0x194] sm:$0xf] %v1765
    %2022 = vst [vmem:[#allocation8 + $0x198] sm:$0xf] %v1766
    %2023 = vst [vmem:[#allocation8 + $0x19c] sm:$0xf] %v1767
    %2024 = vst [vmem:[#allocation8 + $0x1a0] sm:$0xf] %v1768
    %2025 = vst [vmem:[#allocation8 + $0x1a4] sm:$0xf] %v1769
    %2026 = vst [vmem:[#allocation8 + $0x1a8] sm:$0xf] %v1770
    %2027 = vst [vmem:[#allocation8 + $0x1ac] sm:$0xf] %v1771
    %2028 = vst [vmem:[#allocation8 + $0x1b0] sm:$0xf] %v1772
    %2029 = vst [vmem:[#allocation8 + $0x1b4] sm:$0xf] %v1773
    %2030 = vst [vmem:[#allocation8 + $0x1b8] sm:$0xf] %v1774
    %2031 = vst [vmem:[#allocation8 + $0x1bc] sm:$0xf] %v1775
    %2032 = vst [vmem:[#allocation8 + $0x1c0] sm:$0xf] %v1776
    %2033 = vst [vmem:[#allocation8 + $0x1c4] sm:$0xf] %v1777
    %2034 = vst [vmem:[#allocation8 + $0x1c8] sm:$0xf] %v1778
    %2035 = vst [vmem:[#allocation8 + $0x1cc] sm:$0xf] %v1779
    %2036 = vst [vmem:[#allocation8 + $0x1d0] sm:$0xf] %v1780
    %2037 = vst [vmem:[#allocation8 + $0x1d4] sm:$0xf] %v1781
    %2038 = vst [vmem:[#allocation8 + $0x1d8] sm:$0xf] %v1782
    %2039 = vst [vmem:[#allocation8 + $0x1dc] sm:$0xf] %v1783
    %2040 = vst [vmem:[#allocation8 + $0x1e0] sm:$0xf] %v1784
    %2041 = vst [vmem:[#allocation8 + $0x1e4] sm:$0xf] %v1785
    %2042 = vst [vmem:[#allocation8 + $0x1e8] sm:$0xf] %v1786
    %2043 = vst [vmem:[#allocation8 + $0x1ec] sm:$0xf] %v1787
    %2044 = vst [vmem:[#allocation8 + $0x1f0] sm:$0xf] %v1788
    %2045 = vst [vmem:[#allocation8 + $0x1f4] sm:$0xf] %v1789
    %2046 = vst [vmem:[#allocation8 + $0x1f8] sm:$0xf] %v1790
    %2047 = vst [vmem:[#allocation8 + $0x1fc] sm:$0xf] %v1791
    // Predicated region
    $region26: #{tpu_custom_call.1} parent=1 // pred_check
      _
    $region27: #{tpu_custom_call.1} parent=1 // pred_check_branch
      %2049 = sbr.rel (0) target = $region29
    $region28: #{tpu_custom_call.1} parent=1 // pred_region
      %s2051 = ssub.s32 8192, 8192
      %2052 = vsyncadd [#allocation4], %s2051
      %s2053 = sshll.u32 [#allocation8], 4
      %s2054 = int_to_ptr.vmem [resolvable:$true] %s2053
      %2059 = dma.vmem_to_hbm [thread:$0]  %s2054, 8192, %s3, [#allocation4], 64, 64, 4
    $region29: #{tpu_custom_call.1} parent=1 // pred_fallthru
      _
    // Predicated region
    $region30: #{tpu_custom_call.1} parent=1 // pred_check
      _
    $region31: #{tpu_custom_call.1} parent=1 // pred_check_branch
      %2061 = sbr.rel (0) target = $region33
    $region32: #{tpu_custom_call.1} parent=1 // pred_region
      %2062 = dma.done [#allocation4], 8192
    $region33: #{tpu_custom_call.1} parent=1 // pred_fallthru
      _
    %2063 = vsyncpa [#allocation3], 1
    %2064 = vsyncpa [#allocation6], 1
    %2065 = vsyncpa [#allocation4], 1

</llo_original>
